<compile_context>
chip_gen: v6e
topology: v6e:2x2x1
jax: 0.10.0
libtpu: 0.0.40
codegen_flags: <defaults>
</compile_context>

<pallas_src>
import functools

import jax
import jax.numpy as jnp
from jax.experimental import pallas as pl
from jax.experimental.pallas import tpu as pltpu


def _round_up(x, m):
    return ((x + m - 1) // m) * m


def _head_kernel(x_ref, w_ref, b_ref, o_ref):
    """Single-step fused (normalize ∘ linear head).

    Normalization is folded into w/b on the host (once), so the kernel body is
    a plain matmul + bias:
      x_ref: (Bp, D) bf16   raw-pixel activations
      w_ref: (D,  N) bf16   normalization-folded weights
      b_ref: (1,  N) f32    normalization-folded bias
      o_ref: (Bp, N) f32    logits
    """
    o_ref[...] = (
        jnp.dot(x_ref[...], w_ref[...], preferred_element_type=jnp.float32)
        + b_ref[...]
    )


def fold_head_params(means, stds, W_fc, b_fc, spatial, largest=255.0,
                     stream_dtype=jnp.bfloat16):
    """One-time fold of (X/largest - mean)/std into the linear head.

    (X/largest - mean)/std @ W + b  ==  X @ (scale*W) + (shift @ W + b)
    with per-input-feature scale/shift (channel-major NCHW flatten: each
    per-channel constant repeats over the H*W spatial positions).

    Call ONCE; reuse (W_eff, b_eff) for every forward — this removes the
    per-call full-weight scale/cast/pad HBM passes flagged in review.
    """
    stds_f = stds.astype(jnp.float32)
    means_f = means.astype(jnp.float32)
    scale = jnp.repeat(1.0 / (largest * stds_f), spatial)            # (D,)
    shift = jnp.repeat(-means_f / stds_f, spatial)                   # (D,)
    W_f32 = W_fc.astype(jnp.float32)
    W_eff = (W_f32 * scale[:, None]).astype(stream_dtype)            # (D, N)
    b_eff = (shift @ W_f32 + b_fc.astype(jnp.float32)).reshape(1, -1)  # (1, N)
    return W_eff, b_eff


@jax.jit
def classifier_forward(X, W_eff, b_eff):
    """X: (B, C, H, W) float pixels in [0, largest].  Returns (B, N) f32 logits."""
    B, C, H, W = X.shape
    D = C * H * W
    N = W_eff.shape[1]

    # Per-call work on activations only: flatten, cast to bf16, pad batch rows.
    Bp = _round_up(max(B, 16), 16)
    x2d = X.reshape(B, D).astype(W_eff.dtype)
    if Bp != B:
        x2d = jnp.pad(x2d, ((0, Bp - B), (0, 0)))

    # Whole-array blocks in VMEM, no grid: one kernel step.
    # TODO(synk): for a real backbone head with large D/N, reintroduce an
    # (M, N, K)-tiled grid (K last, f32 VMEM accumulator, tk>=1024).
    out = pl.pallas_call(
        _head_kernel,
        out_shape=jax.ShapeDtypeStruct((Bp, N), jnp.float32),
        in_specs=[
            pl.BlockSpec(memory_space=pltpu.MemorySpace.VMEM),  # X   (Bp, D)
            pl.BlockSpec(memory_space=pltpu.MemorySpace.VMEM),  # W   (D,  N)
            pl.BlockSpec(memory_space=pltpu.MemorySpace.VMEM),  # b   (1,  N)
        ],
        out_specs=pl.BlockSpec(memory_space=pltpu.MemorySpace.VMEM),
    )(x2d, W_eff, b_eff)

    return out[:B]


if __name__ == "__main__":
    # Shapes consistent with the module (3-channel means/stds, size=32 default).
    B, C, H, W = 2, 3, 32, 32
    num_classes = 10
    D = C * H * W

    key = jax.random.PRNGKey(0)
    kx, kw, kb = jax.random.split(key, 3)

    # Pixels in [0, 255], as implied by `self.largest = 255`.
    X = jax.random.uniform(kx, (B, C, H, W), jnp.float32, 0.0, 255.0)

    # Normalization constants from the module.
    means = jnp.array([0.5071, 0.4865, 0.4409], jnp.float32)
    stds = jnp.array([0.2009, 0.1984, 0.2023], jnp.float32)

    # Deterministic synthetic classifier-head parameters (backbone stand-in).
    W_fc = jax.random.normal(kw, (D, num_classes), jnp.float32) * 0.02
    b_fc = jax.random.normal(kb, (num_classes,), jnp.float32) * 0.01

    # One-time parameter fold (hoisted out of the per-call path).
    W_eff, b_eff = fold_head_params(means, stds, W_fc, b_fc, H * W)

    logits = classifier_forward(X, W_eff, b_eff)
    jax.block_until_ready(logits)

    # Plain-JAX reference for the same forward (normalize in NCHW, then head).
    X_norm = (X / 255.0 - means.reshape(1, C, 1, 1)) / stds.reshape(1, C, 1, 1)
    ref = X_norm.reshape(B, D) @ W_fc + b_fc

    assert logits.shape == (B, num_classes)
    # bf16 activation/weight streaming => small quantization error vs f32 ref.
    assert jnp.allclose(logits, ref, atol=5e-2, rtol=5e-2), (
        "max abs err", float(jnp.max(jnp.abs(logits - ref))))

    print("KERNEL_OK")
</pallas_src>

<mosaic_0001>
module attributes {stable_mosaic.version = 11 : i64} {
  func.func @_head_kernel(%arg0: memref<16x3072xbf16, #tpu.memory_space<vmem>>, %arg1: memref<3072x10xbf16, #tpu.memory_space<vmem>>, %arg2: memref<1x10xf32, #tpu.memory_space<vmem>>, %arg3: memref<16x10xf32, #tpu.memory_space<vmem>>) attributes {dimension_semantics = [], scalar_prefetch = 0 : i64, scratch_operands = 0 : i64, tpu.core_type = #tpu.core_type<tc>} {
    %c0 = arith.constant 0 : index
    %c0_0 = arith.constant 0 : index
    %0 = vector.load %arg0[%c0, %c0_0] : memref<16x3072xbf16, #tpu.memory_space<vmem>>, vector<16x3072xbf16>
    %c0_1 = arith.constant 0 : index
    %c0_2 = arith.constant 0 : index
    %1 = vector.load %arg1[%c0_1, %c0_2] : memref<3072x10xbf16, #tpu.memory_space<vmem>>, vector<3072x10xbf16>
    %cst = arith.constant dense<0.000000e+00> : vector<16x10xf32>
    %2 = tpu.matmul %0, %1, %cst {dimension_numbers = #tpu.dot_dimension_numbers<[1], [0], [0], [1], [0, 0, 1, 1], [], []>} : vector<16x3072xbf16>, vector<3072x10xbf16>, vector<16x10xf32> -> vector<16x10xf32>
    %c0_3 = arith.constant 0 : index
    %c0_4 = arith.constant 0 : index
    %3 = vector.load %arg2[%c0_3, %c0_4] : memref<1x10xf32, #tpu.memory_space<vmem>>, vector<1x10xf32>
    %4 = vector.broadcast %3 : vector<1x10xf32> to vector<16x10xf32>
    %5 = arith.addf %2, %4 : vector<16x10xf32>
    %c0_5 = arith.constant 0 : index
    %c0_6 = arith.constant 0 : index
    %6 = vector.load %arg3[%c0_5, %c0_6] : memref<16x10xf32, #tpu.memory_space<vmem>>, vector<16x10xf32>
    tpu.vector_store %arg3[%c0_5, %c0_6], %5 {strides = array<i32>} : memref<16x10xf32, #tpu.memory_space<vmem>>, vector<16x10xf32>,
    return
  }
}

</mosaic_0001>

<llo_original>
// kernel: classifier_forward.1
$region0: #{classifier_forward.1}
  #allocation0 [shape = 'u32[]', space=smem, size = 0x4, offset = 0x4, fixed_abs, tag = 'smem constant byte address 0x4 - core index']
  #allocation1 [shape = 'u32[144,128]{1,0:T(1,128)}', space=vmem, size = 0x12000, scoped, tag = 'internal scratch']
  %s0 = inlined_call_operand.vmem [shape: bf16[16,3072], index: 0, kind: input, shape index: {}]
  %s1 = inlined_call_operand.vmem [shape: bf16[3072,10], index: 1, kind: input, shape index: {}]
  %s2 = inlined_call_operand.vmem [shape: f32[1,10], index: 2, kind: input, shape index: {}]
  %s3 = inlined_call_operand.vmem [shape: f32[16,10], index: 3, kind: output, shape index: {}]
  %s4 = sld [smem:[#allocation0]]
  $region22: #{classifier_forward.1} parent=0
    _
  %s6 = ssub.s32 1, %s4
  %s7 = scalar_select 0, %s6, %s4
  // Predicated region
  $region2: #{classifier_forward.1} parent=0 // pred_check
    _
  $region3: #{classifier_forward.1} parent=0 // pred_check_branch
    %9 = sbr.rel (0) target = $region5
  $region4: #{classifier_forward.1} parent=0 // pred_region
    _
  $region5: #{classifier_forward.1} parent=0 // pred_fallthru
    _
  // Predicated region
  $region6: #{classifier_forward.1} parent=0 // pred_check
    _
  $region7: #{classifier_forward.1} parent=0 // pred_check_branch
    %11 = sbr.rel (0) target = $region9
  $region8: #{classifier_forward.1} parent=0 // pred_region
    _
  $region9: #{classifier_forward.1} parent=0 // pred_fallthru
    _
  // Predicated region
  $region10: #{classifier_forward.1} parent=0 // pred_check
    _
  $region11: #{classifier_forward.1} parent=0 // pred_check_branch
    %13 = sbr.rel (0) target = $region13
  $region12: #{classifier_forward.1} parent=0 // pred_region
    _
  $region13: #{classifier_forward.1} parent=0 // pred_fallthru
    _
  %v15 = vld [vmem:[%s0] sm:$0xff]
  %v16 = vld [vmem:[%s0 + $0x8] sm:$0xff]
  %v17 = vld [vmem:[%s0 + $0x10] sm:$0xff]
  %v18 = vld [vmem:[%s0 + $0x18] sm:$0xff]
  %v19 = vld [vmem:[%s0 + $0x20] sm:$0xff]
  %v20 = vld [vmem:[%s0 + $0x28] sm:$0xff]
  %v21 = vld [vmem:[%s0 + $0x30] sm:$0xff]
  %v22 = vld [vmem:[%s0 + $0x38] sm:$0xff]
  %v23 = vld [vmem:[%s0 + $0x40] sm:$0xff]
  %v24 = vld [vmem:[%s0 + $0x48] sm:$0xff]
  %v25 = vld [vmem:[%s0 + $0x50] sm:$0xff]
  %v26 = vld [vmem:[%s0 + $0x58] sm:$0xff]
  %v27 = vld [vmem:[%s0 + $0x60] sm:$0xff]
  %v28 = vld [vmem:[%s0 + $0x68] sm:$0xff]
  %v29 = vld [vmem:[%s0 + $0x70] sm:$0xff]
  %v30 = vld [vmem:[%s0 + $0x78] sm:$0xff]
  %v31 = vld [vmem:[%s0 + $0x80] sm:$0xff]
  %v32 = vld [vmem:[%s0 + $0x88] sm:$0xff]
  %v33 = vld [vmem:[%s0 + $0x90] sm:$0xff]
  %v34 = vld [vmem:[%s0 + $0x98] sm:$0xff]
  %v35 = vld [vmem:[%s0 + $0xa0] sm:$0xff]
  %v36 = vld [vmem:[%s0 + $0xa8] sm:$0xff]
  %v37 = vld [vmem:[%s0 + $0xb0] sm:$0xff]
  %v38 = vld [vmem:[%s0 + $0xb8] sm:$0xff]
  %v39 = vld [vmem:[%s1] sm:$0xf]
  %v40 = vld [vmem:[%s1 + $0x4] sm:$0xf]
  %v41 = vld [vmem:[%s1 + $0x8] sm:$0xf]
  %v42 = vld [vmem:[%s1 + $0xc] sm:$0xf]
  %v43 = vld [vmem:[%s1 + $0x10] sm:$0xf]
  %v44 = vld [vmem:[%s1 + $0x14] sm:$0xf]
  %v45 = vld [vmem:[%s1 + $0x18] sm:$0xf]
  %v46 = vld [vmem:[%s1 + $0x1c] sm:$0xf]
  %v47 = vld [vmem:[%s1 + $0x20] sm:$0xf]
  %v48 = vld [vmem:[%s1 + $0x24] sm:$0xf]
  %v49 = vld [vmem:[%s1 + $0x28] sm:$0xf]
  %v50 = vld [vmem:[%s1 + $0x2c] sm:$0xf]
  %v51 = vld [vmem:[%s1 + $0x30] sm:$0xf]
  %v52 = vld [vmem:[%s1 + $0x34] sm:$0xf]
  %v53 = vld [vmem:[%s1 + $0x38] sm:$0xf]
  %v54 = vld [vmem:[%s1 + $0x3c] sm:$0xf]
  %v55 = vld [vmem:[%s1 + $0x40] sm:$0xf]
  %v56 = vld [vmem:[%s1 + $0x44] sm:$0xf]
  %v57 = vld [vmem:[%s1 + $0x48] sm:$0xf]
  %v58 = vld [vmem:[%s1 + $0x4c] sm:$0xf]
  %v59 = vld [vmem:[%s1 + $0x50] sm:$0xf]
  %v60 = vld [vmem:[%s1 + $0x54] sm:$0xf]
  %v61 = vld [vmem:[%s1 + $0x58] sm:$0xf]
  %v62 = vld [vmem:[%s1 + $0x5c] sm:$0xf]
  %v63 = vld [vmem:[%s1 + $0x60] sm:$0xf]
  %v64 = vld [vmem:[%s1 + $0x64] sm:$0xf]
  %v65 = vld [vmem:[%s1 + $0x68] sm:$0xf]
  %v66 = vld [vmem:[%s1 + $0x6c] sm:$0xf]
  %v67 = vld [vmem:[%s1 + $0x70] sm:$0xf]
  %v68 = vld [vmem:[%s1 + $0x74] sm:$0xf]
  %v69 = vld [vmem:[%s1 + $0x78] sm:$0xf]
  %v70 = vld [vmem:[%s1 + $0x7c] sm:$0xf]
  %v71 = vld [vmem:[%s1 + $0x80] sm:$0xf]
  %v72 = vld [vmem:[%s1 + $0x84] sm:$0xf]
  %v73 = vld [vmem:[%s1 + $0x88] sm:$0xf]
  %v74 = vld [vmem:[%s1 + $0x8c] sm:$0xf]
  %v75 = vld [vmem:[%s1 + $0x90] sm:$0xf]
  %v76 = vld [vmem:[%s1 + $0x94] sm:$0xf]
  %v77 = vld [vmem:[%s1 + $0x98] sm:$0xf]
  %v78 = vld [vmem:[%s1 + $0x9c] sm:$0xf]
  %v79 = vld [vmem:[%s1 + $0xa0] sm:$0xf]
  %v80 = vld [vmem:[%s1 + $0xa4] sm:$0xf]
  %v81 = vld [vmem:[%s1 + $0xa8] sm:$0xf]
  %v82 = vld [vmem:[%s1 + $0xac] sm:$0xf]
  %v83 = vld [vmem:[%s1 + $0xb0] sm:$0xf]
  %v84 = vld [vmem:[%s1 + $0xb4] sm:$0xf]
  %v85 = vld [vmem:[%s1 + $0xb8] sm:$0xf]
  %v86 = vld [vmem:[%s1 + $0xbc] sm:$0xf]
  %v87 = vld [vmem:[%s1 + $0xc0] sm:$0xf]
  %v88 = vld [vmem:[%s1 + $0xc4] sm:$0xf]
  %v89 = vld [vmem:[%s1 + $0xc8] sm:$0xf]
  %v90 = vld [vmem:[%s1 + $0xcc] sm:$0xf]
  %v91 = vld [vmem:[%s1 + $0xd0] sm:$0xf]
  %v92 = vld [vmem:[%s1 + $0xd4] sm:$0xf]
  %v93 = vld [vmem:[%s1 + $0xd8] sm:$0xf]
  %v94 = vld [vmem:[%s1 + $0xdc] sm:$0xf]
  %v95 = vld [vmem:[%s1 + $0xe0] sm:$0xf]
  %v96 = vld [vmem:[%s1 + $0xe4] sm:$0xf]
  %v97 = vld [vmem:[%s1 + $0xe8] sm:$0xf]
  %v98 = vld [vmem:[%s1 + $0xec] sm:$0xf]
  %v99 = vld [vmem:[%s1 + $0xf0] sm:$0xf]
  %v100 = vld [vmem:[%s1 + $0xf4] sm:$0xf]
  %v101 = vld [vmem:[%s1 + $0xf8] sm:$0xf]
  %v102 = vld [vmem:[%s1 + $0xfc] sm:$0xf]
  %v103 = vld [vmem:[%s1 + $0x100] sm:$0xf]
  %v104 = vld [vmem:[%s1 + $0x104] sm:$0xf]
  %v105 = vld [vmem:[%s1 + $0x108] sm:$0xf]
  %v106 = vld [vmem:[%s1 + $0x10c] sm:$0xf]
  %v107 = vld [vmem:[%s1 + $0x110] sm:$0xf]
  %v108 = vld [vmem:[%s1 + $0x114] sm:$0xf]
  %v109 = vld [vmem:[%s1 + $0x118] sm:$0xf]
  %v110 = vld [vmem:[%s1 + $0x11c] sm:$0xf]
  %v111 = vld [vmem:[%s1 + $0x120] sm:$0xf]
  %v112 = vld [vmem:[%s1 + $0x124] sm:$0xf]
  %v113 = vld [vmem:[%s1 + $0x128] sm:$0xf]
  %v114 = vld [vmem:[%s1 + $0x12c] sm:$0xf]
  %v115 = vld [vmem:[%s1 + $0x130] sm:$0xf]
  %v116 = vld [vmem:[%s1 + $0x134] sm:$0xf]
  %v117 = vld [vmem:[%s1 + $0x138] sm:$0xf]
  %v118 = vld [vmem:[%s1 + $0x13c] sm:$0xf]
  %v119 = vld [vmem:[%s1 + $0x140] sm:$0xf]
  %v120 = vld [vmem:[%s1 + $0x144] sm:$0xf]
  %v121 = vld [vmem:[%s1 + $0x148] sm:$0xf]
  %v122 = vld [vmem:[%s1 + $0x14c] sm:$0xf]
  %v123 = vld [vmem:[%s1 + $0x150] sm:$0xf]
  %v124 = vld [vmem:[%s1 + $0x154] sm:$0xf]
  %v125 = vld [vmem:[%s1 + $0x158] sm:$0xf]
  %v126 = vld [vmem:[%s1 + $0x15c] sm:$0xf]
  %v127 = vld [vmem:[%s1 + $0x160] sm:$0xf]
  %v128 = vld [vmem:[%s1 + $0x164] sm:$0xf]
  %v129 = vld [vmem:[%s1 + $0x168] sm:$0xf]
  %v130 = vld [vmem:[%s1 + $0x16c] sm:$0xf]
  %v131 = vld [vmem:[%s1 + $0x170] sm:$0xf]
  %v132 = vld [vmem:[%s1 + $0x174] sm:$0xf]
  %v133 = vld [vmem:[%s1 + $0x178] sm:$0xf]
  %v134 = vld [vmem:[%s1 + $0x17c] sm:$0xf]
  %v135 = vld [vmem:[%s1 + $0x180] sm:$0xf]
  %v136 = vld [vmem:[%s1 + $0x184] sm:$0xf]
  %v137 = vld [vmem:[%s1 + $0x188] sm:$0xf]
  %v138 = vld [vmem:[%s1 + $0x18c] sm:$0xf]
  %v139 = vld [vmem:[%s1 + $0x190] sm:$0xf]
  %v140 = vld [vmem:[%s1 + $0x194] sm:$0xf]
  %v141 = vld [vmem:[%s1 + $0x198] sm:$0xf]
  %v142 = vld [vmem:[%s1 + $0x19c] sm:$0xf]
  %v143 = vld [vmem:[%s1 + $0x1a0] sm:$0xf]
  %v144 = vld [vmem:[%s1 + $0x1a4] sm:$0xf]
  %v145 = vld [vmem:[%s1 + $0x1a8] sm:$0xf]
  %v146 = vld [vmem:[%s1 + $0x1ac] sm:$0xf]
  %v147 = vld [vmem:[%s1 + $0x1b0] sm:$0xf]
  %v148 = vld [vmem:[%s1 + $0x1b4] sm:$0xf]
  %v149 = vld [vmem:[%s1 + $0x1b8] sm:$0xf]
  %v150 = vld [vmem:[%s1 + $0x1bc] sm:$0xf]
  %v151 = vld [vmem:[%s1 + $0x1c0] sm:$0xf]
  %v152 = vld [vmem:[%s1 + $0x1c4] sm:$0xf]
  %v153 = vld [vmem:[%s1 + $0x1c8] sm:$0xf]
  %v154 = vld [vmem:[%s1 + $0x1cc] sm:$0xf]
  %v155 = vld [vmem:[%s1 + $0x1d0] sm:$0xf]
  %v156 = vld [vmem:[%s1 + $0x1d4] sm:$0xf]
  %v157 = vld [vmem:[%s1 + $0x1d8] sm:$0xf]
  %v158 = vld [vmem:[%s1 + $0x1dc] sm:$0xf]
  %v159 = vld [vmem:[%s1 + $0x1e0] sm:$0xf]
  %v160 = vld [vmem:[%s1 + $0x1e4] sm:$0xf]
  %v161 = vld [vmem:[%s1 + $0x1e8] sm:$0xf]
  %v162 = vld [vmem:[%s1 + $0x1ec] sm:$0xf]
  %v163 = vld [vmem:[%s1 + $0x1f0] sm:$0xf]
  %v164 = vld [vmem:[%s1 + $0x1f4] sm:$0xf]
  %v165 = vld [vmem:[%s1 + $0x1f8] sm:$0xf]
  %v166 = vld [vmem:[%s1 + $0x1fc] sm:$0xf]
  %v167 = vld [vmem:[%s1 + $0x200] sm:$0xf]
  %v168 = vld [vmem:[%s1 + $0x204] sm:$0xf]
  %v169 = vld [vmem:[%s1 + $0x208] sm:$0xf]
  %v170 = vld [vmem:[%s1 + $0x20c] sm:$0xf]
  %v171 = vld [vmem:[%s1 + $0x210] sm:$0xf]
  %v172 = vld [vmem:[%s1 + $0x214] sm:$0xf]
  %v173 = vld [vmem:[%s1 + $0x218] sm:$0xf]
  %v174 = vld [vmem:[%s1 + $0x21c] sm:$0xf]
  %v175 = vld [vmem:[%s1 + $0x220] sm:$0xf]
  %v176 = vld [vmem:[%s1 + $0x224] sm:$0xf]
  %v177 = vld [vmem:[%s1 + $0x228] sm:$0xf]
  %v178 = vld [vmem:[%s1 + $0x22c] sm:$0xf]
  %v179 = vld [vmem:[%s1 + $0x230] sm:$0xf]
  %v180 = vld [vmem:[%s1 + $0x234] sm:$0xf]
  %v181 = vld [vmem:[%s1 + $0x238] sm:$0xf]
  %v182 = vld [vmem:[%s1 + $0x23c] sm:$0xf]
  %v183 = vld [vmem:[%s1 + $0x240] sm:$0xf]
  %v184 = vld [vmem:[%s1 + $0x244] sm:$0xf]
  %v185 = vld [vmem:[%s1 + $0x248] sm:$0xf]
  %v186 = vld [vmem:[%s1 + $0x24c] sm:$0xf]
  %v187 = vld [vmem:[%s1 + $0x250] sm:$0xf]
  %v188 = vld [vmem:[%s1 + $0x254] sm:$0xf]
  %v189 = vld [vmem:[%s1 + $0x258] sm:$0xf]
  %v190 = vld [vmem:[%s1 + $0x25c] sm:$0xf]
  %v191 = vld [vmem:[%s1 + $0x260] sm:$0xf]
  %v192 = vld [vmem:[%s1 + $0x264] sm:$0xf]
  %v193 = vld [vmem:[%s1 + $0x268] sm:$0xf]
  %v194 = vld [vmem:[%s1 + $0x26c] sm:$0xf]
  %v195 = vld [vmem:[%s1 + $0x270] sm:$0xf]
  %v196 = vld [vmem:[%s1 + $0x274] sm:$0xf]
  %v197 = vld [vmem:[%s1 + $0x278] sm:$0xf]
  %v198 = vld [vmem:[%s1 + $0x27c] sm:$0xf]
  %v199 = vld [vmem:[%s1 + $0x280] sm:$0xf]
  %v200 = vld [vmem:[%s1 + $0x284] sm:$0xf]
  %v201 = vld [vmem:[%s1 + $0x288] sm:$0xf]
  %v202 = vld [vmem:[%s1 + $0x28c] sm:$0xf]
  %v203 = vld [vmem:[%s1 + $0x290] sm:$0xf]
  %v204 = vld [vmem:[%s1 + $0x294] sm:$0xf]
  %v205 = vld [vmem:[%s1 + $0x298] sm:$0xf]
  %v206 = vld [vmem:[%s1 + $0x29c] sm:$0xf]
  %v207 = vld [vmem:[%s1 + $0x2a0] sm:$0xf]
  %v208 = vld [vmem:[%s1 + $0x2a4] sm:$0xf]
  %v209 = vld [vmem:[%s1 + $0x2a8] sm:$0xf]
  %v210 = vld [vmem:[%s1 + $0x2ac] sm:$0xf]
  %v211 = vld [vmem:[%s1 + $0x2b0] sm:$0xf]
  %v212 = vld [vmem:[%s1 + $0x2b4] sm:$0xf]
  %v213 = vld [vmem:[%s1 + $0x2b8] sm:$0xf]
  %v214 = vld [vmem:[%s1 + $0x2bc] sm:$0xf]
  %v215 = vld [vmem:[%s1 + $0x2c0] sm:$0xf]
  %v216 = vld [vmem:[%s1 + $0x2c4] sm:$0xf]
  %v217 = vld [vmem:[%s1 + $0x2c8] sm:$0xf]
  %v218 = vld [vmem:[%s1 + $0x2cc] sm:$0xf]
  %v219 = vld [vmem:[%s1 + $0x2d0] sm:$0xf]
  %v220 = vld [vmem:[%s1 + $0x2d4] sm:$0xf]
  %v221 = vld [vmem:[%s1 + $0x2d8] sm:$0xf]
  %v222 = vld [vmem:[%s1 + $0x2dc] sm:$0xf]
  %v223 = vld [vmem:[%s1 + $0x2e0] sm:$0xf]
  %v224 = vld [vmem:[%s1 + $0x2e4] sm:$0xf]
  %v225 = vld [vmem:[%s1 + $0x2e8] sm:$0xf]
  %v226 = vld [vmem:[%s1 + $0x2ec] sm:$0xf]
  %v227 = vld [vmem:[%s1 + $0x2f0] sm:$0xf]
  %v228 = vld [vmem:[%s1 + $0x2f4] sm:$0xf]
  %v229 = vld [vmem:[%s1 + $0x2f8] sm:$0xf]
  %v230 = vld [vmem:[%s1 + $0x2fc] sm:$0xf]
  %v231 = vld [vmem:[%s1 + $0x300] sm:$0xf]
  %v232 = vld [vmem:[%s1 + $0x304] sm:$0xf]
  %v233 = vld [vmem:[%s1 + $0x308] sm:$0xf]
  %v234 = vld [vmem:[%s1 + $0x30c] sm:$0xf]
  %v235 = vld [vmem:[%s1 + $0x310] sm:$0xf]
  %v236 = vld [vmem:[%s1 + $0x314] sm:$0xf]
  %v237 = vld [vmem:[%s1 + $0x318] sm:$0xf]
  %v238 = vld [vmem:[%s1 + $0x31c] sm:$0xf]
  %v239 = vld [vmem:[%s1 + $0x320] sm:$0xf]
  %v240 = vld [vmem:[%s1 + $0x324] sm:$0xf]
  %v241 = vld [vmem:[%s1 + $0x328] sm:$0xf]
  %v242 = vld [vmem:[%s1 + $0x32c] sm:$0xf]
  %v243 = vld [vmem:[%s1 + $0x330] sm:$0xf]
  %v244 = vld [vmem:[%s1 + $0x334] sm:$0xf]
  %v245 = vld [vmem:[%s1 + $0x338] sm:$0xf]
  %v246 = vld [vmem:[%s1 + $0x33c] sm:$0xf]
  %v247 = vld [vmem:[%s1 + $0x340] sm:$0xf]
  %v248 = vld [vmem:[%s1 + $0x344] sm:$0xf]
  %v249 = vld [vmem:[%s1 + $0x348] sm:$0xf]
  %v250 = vld [vmem:[%s1 + $0x34c] sm:$0xf]
  %v251 = vld [vmem:[%s1 + $0x350] sm:$0xf]
  %v252 = vld [vmem:[%s1 + $0x354] sm:$0xf]
  %v253 = vld [vmem:[%s1 + $0x358] sm:$0xf]
  %v254 = vld [vmem:[%s1 + $0x35c] sm:$0xf]
  %v255 = vld [vmem:[%s1 + $0x360] sm:$0xf]
  %v256 = vld [vmem:[%s1 + $0x364] sm:$0xf]
  %v257 = vld [vmem:[%s1 + $0x368] sm:$0xf]
  %v258 = vld [vmem:[%s1 + $0x36c] sm:$0xf]
  %v259 = vld [vmem:[%s1 + $0x370] sm:$0xf]
  %v260 = vld [vmem:[%s1 + $0x374] sm:$0xf]
  %v261 = vld [vmem:[%s1 + $0x378] sm:$0xf]
  %v262 = vld [vmem:[%s1 + $0x37c] sm:$0xf]
  %v263 = vld [vmem:[%s1 + $0x380] sm:$0xf]
  %v264 = vld [vmem:[%s1 + $0x384] sm:$0xf]
  %v265 = vld [vmem:[%s1 + $0x388] sm:$0xf]
  %v266 = vld [vmem:[%s1 + $0x38c] sm:$0xf]
  %v267 = vld [vmem:[%s1 + $0x390] sm:$0xf]
  %v268 = vld [vmem:[%s1 + $0x394] sm:$0xf]
  %v269 = vld [vmem:[%s1 + $0x398] sm:$0xf]
  %v270 = vld [vmem:[%s1 + $0x39c] sm:$0xf]
  %v271 = vld [vmem:[%s1 + $0x3a0] sm:$0xf]
  %v272 = vld [vmem:[%s1 + $0x3a4] sm:$0xf]
  %v273 = vld [vmem:[%s1 + $0x3a8] sm:$0xf]
  %v274 = vld [vmem:[%s1 + $0x3ac] sm:$0xf]
  %v275 = vld [vmem:[%s1 + $0x3b0] sm:$0xf]
  %v276 = vld [vmem:[%s1 + $0x3b4] sm:$0xf]
  %v277 = vld [vmem:[%s1 + $0x3b8] sm:$0xf]
  %v278 = vld [vmem:[%s1 + $0x3bc] sm:$0xf]
  %v279 = vld [vmem:[%s1 + $0x3c0] sm:$0xf]
  %v280 = vld [vmem:[%s1 + $0x3c4] sm:$0xf]
  %v281 = vld [vmem:[%s1 + $0x3c8] sm:$0xf]
  %v282 = vld [vmem:[%s1 + $0x3cc] sm:$0xf]
  %v283 = vld [vmem:[%s1 + $0x3d0] sm:$0xf]
  %v284 = vld [vmem:[%s1 + $0x3d4] sm:$0xf]
  %v285 = vld [vmem:[%s1 + $0x3d8] sm:$0xf]
  %v286 = vld [vmem:[%s1 + $0x3dc] sm:$0xf]
  %v287 = vld [vmem:[%s1 + $0x3e0] sm:$0xf]
  %v288 = vld [vmem:[%s1 + $0x3e4] sm:$0xf]
  %v289 = vld [vmem:[%s1 + $0x3e8] sm:$0xf]
  %v290 = vld [vmem:[%s1 + $0x3ec] sm:$0xf]
  %v291 = vld [vmem:[%s1 + $0x3f0] sm:$0xf]
  %v292 = vld [vmem:[%s1 + $0x3f4] sm:$0xf]
  %v293 = vld [vmem:[%s1 + $0x3f8] sm:$0xf]
  %v294 = vld [vmem:[%s1 + $0x3fc] sm:$0xf]
  %v295 = vld [vmem:[%s1 + $0x400] sm:$0xf]
  %v296 = vld [vmem:[%s1 + $0x404] sm:$0xf]
  %v297 = vld [vmem:[%s1 + $0x408] sm:$0xf]
  %v298 = vld [vmem:[%s1 + $0x40c] sm:$0xf]
  %v299 = vld [vmem:[%s1 + $0x410] sm:$0xf]
  %v300 = vld [vmem:[%s1 + $0x414] sm:$0xf]
  %v301 = vld [vmem:[%s1 + $0x418] sm:$0xf]
  %v302 = vld [vmem:[%s1 + $0x41c] sm:$0xf]
  %v303 = vld [vmem:[%s1 + $0x420] sm:$0xf]
  %v304 = vld [vmem:[%s1 + $0x424] sm:$0xf]
  %v305 = vld [vmem:[%s1 + $0x428] sm:$0xf]
  %v306 = vld [vmem:[%s1 + $0x42c] sm:$0xf]
  %v307 = vld [vmem:[%s1 + $0x430] sm:$0xf]
  %v308 = vld [vmem:[%s1 + $0x434] sm:$0xf]
  %v309 = vld [vmem:[%s1 + $0x438] sm:$0xf]
  %v310 = vld [vmem:[%s1 + $0x43c] sm:$0xf]
  %v311 = vld [vmem:[%s1 + $0x440] sm:$0xf]
  %v312 = vld [vmem:[%s1 + $0x444] sm:$0xf]
  %v313 = vld [vmem:[%s1 + $0x448] sm:$0xf]
  %v314 = vld [vmem:[%s1 + $0x44c] sm:$0xf]
  %v315 = vld [vmem:[%s1 + $0x450] sm:$0xf]
  %v316 = vld [vmem:[%s1 + $0x454] sm:$0xf]
  %v317 = vld [vmem:[%s1 + $0x458] sm:$0xf]
  %v318 = vld [vmem:[%s1 + $0x45c] sm:$0xf]
  %v319 = vld [vmem:[%s1 + $0x460] sm:$0xf]
  %v320 = vld [vmem:[%s1 + $0x464] sm:$0xf]
  %v321 = vld [vmem:[%s1 + $0x468] sm:$0xf]
  %v322 = vld [vmem:[%s1 + $0x46c] sm:$0xf]
  %v323 = vld [vmem:[%s1 + $0x470] sm:$0xf]
  %v324 = vld [vmem:[%s1 + $0x474] sm:$0xf]
  %v325 = vld [vmem:[%s1 + $0x478] sm:$0xf]
  %v326 = vld [vmem:[%s1 + $0x47c] sm:$0xf]
  %v327 = vld [vmem:[%s1 + $0x480] sm:$0xf]
  %v328 = vld [vmem:[%s1 + $0x484] sm:$0xf]
  %v329 = vld [vmem:[%s1 + $0x488] sm:$0xf]
  %v330 = vld [vmem:[%s1 + $0x48c] sm:$0xf]
  %v331 = vld [vmem:[%s1 + $0x490] sm:$0xf]
  %v332 = vld [vmem:[%s1 + $0x494] sm:$0xf]
  %v333 = vld [vmem:[%s1 + $0x498] sm:$0xf]
  %v334 = vld [vmem:[%s1 + $0x49c] sm:$0xf]
  %v335 = vld [vmem:[%s1 + $0x4a0] sm:$0xf]
  %v336 = vld [vmem:[%s1 + $0x4a4] sm:$0xf]
  %v337 = vld [vmem:[%s1 + $0x4a8] sm:$0xf]
  %v338 = vld [vmem:[%s1 + $0x4ac] sm:$0xf]
  %v339 = vld [vmem:[%s1 + $0x4b0] sm:$0xf]
  %v340 = vld [vmem:[%s1 + $0x4b4] sm:$0xf]
  %v341 = vld [vmem:[%s1 + $0x4b8] sm:$0xf]
  %v342 = vld [vmem:[%s1 + $0x4bc] sm:$0xf]
  %v343 = vld [vmem:[%s1 + $0x4c0] sm:$0xf]
  %v344 = vld [vmem:[%s1 + $0x4c4] sm:$0xf]
  %v345 = vld [vmem:[%s1 + $0x4c8] sm:$0xf]
  %v346 = vld [vmem:[%s1 + $0x4cc] sm:$0xf]
  %v347 = vld [vmem:[%s1 + $0x4d0] sm:$0xf]
  %v348 = vld [vmem:[%s1 + $0x4d4] sm:$0xf]
  %v349 = vld [vmem:[%s1 + $0x4d8] sm:$0xf]
  %v350 = vld [vmem:[%s1 + $0x4dc] sm:$0xf]
  %v351 = vld [vmem:[%s1 + $0x4e0] sm:$0xf]
  %v352 = vld [vmem:[%s1 + $0x4e4] sm:$0xf]
  %v353 = vld [vmem:[%s1 + $0x4e8] sm:$0xf]
  %v354 = vld [vmem:[%s1 + $0x4ec] sm:$0xf]
  %v355 = vld [vmem:[%s1 + $0x4f0] sm:$0xf]
  %v356 = vld [vmem:[%s1 + $0x4f4] sm:$0xf]
  %v357 = vld [vmem:[%s1 + $0x4f8] sm:$0xf]
  %v358 = vld [vmem:[%s1 + $0x4fc] sm:$0xf]
  %v359 = vld [vmem:[%s1 + $0x500] sm:$0xf]
  %v360 = vld [vmem:[%s1 + $0x504] sm:$0xf]
  %v361 = vld [vmem:[%s1 + $0x508] sm:$0xf]
  %v362 = vld [vmem:[%s1 + $0x50c] sm:$0xf]
  %v363 = vld [vmem:[%s1 + $0x510] sm:$0xf]
  %v364 = vld [vmem:[%s1 + $0x514] sm:$0xf]
  %v365 = vld [vmem:[%s1 + $0x518] sm:$0xf]
  %v366 = vld [vmem:[%s1 + $0x51c] sm:$0xf]
  %v367 = vld [vmem:[%s1 + $0x520] sm:$0xf]
  %v368 = vld [vmem:[%s1 + $0x524] sm:$0xf]
  %v369 = vld [vmem:[%s1 + $0x528] sm:$0xf]
  %v370 = vld [vmem:[%s1 + $0x52c] sm:$0xf]
  %v371 = vld [vmem:[%s1 + $0x530] sm:$0xf]
  %v372 = vld [vmem:[%s1 + $0x534] sm:$0xf]
  %v373 = vld [vmem:[%s1 + $0x538] sm:$0xf]
  %v374 = vld [vmem:[%s1 + $0x53c] sm:$0xf]
  %v375 = vld [vmem:[%s1 + $0x540] sm:$0xf]
  %v376 = vld [vmem:[%s1 + $0x544] sm:$0xf]
  %v377 = vld [vmem:[%s1 + $0x548] sm:$0xf]
  %v378 = vld [vmem:[%s1 + $0x54c] sm:$0xf]
  %v379 = vld [vmem:[%s1 + $0x550] sm:$0xf]
  %v380 = vld [vmem:[%s1 + $0x554] sm:$0xf]
  %v381 = vld [vmem:[%s1 + $0x558] sm:$0xf]
  %v382 = vld [vmem:[%s1 + $0x55c] sm:$0xf]
  %v383 = vld [vmem:[%s1 + $0x560] sm:$0xf]
  %v384 = vld [vmem:[%s1 + $0x564] sm:$0xf]
  %v385 = vld [vmem:[%s1 + $0x568] sm:$0xf]
  %v386 = vld [vmem:[%s1 + $0x56c] sm:$0xf]
  %v387 = vld [vmem:[%s1 + $0x570] sm:$0xf]
  %v388 = vld [vmem:[%s1 + $0x574] sm:$0xf]
  %v389 = vld [vmem:[%s1 + $0x578] sm:$0xf]
  %v390 = vld [vmem:[%s1 + $0x57c] sm:$0xf]
  %v391 = vld [vmem:[%s1 + $0x580] sm:$0xf]
  %v392 = vld [vmem:[%s1 + $0x584] sm:$0xf]
  %v393 = vld [vmem:[%s1 + $0x588] sm:$0xf]
  %v394 = vld [vmem:[%s1 + $0x58c] sm:$0xf]
  %v395 = vld [vmem:[%s1 + $0x590] sm:$0xf]
  %v396 = vld [vmem:[%s1 + $0x594] sm:$0xf]
  %v397 = vld [vmem:[%s1 + $0x598] sm:$0xf]
  %v398 = vld [vmem:[%s1 + $0x59c] sm:$0xf]
  %v399 = vld [vmem:[%s1 + $0x5a0] sm:$0xf]
  %v400 = vld [vmem:[%s1 + $0x5a4] sm:$0xf]
  %v401 = vld [vmem:[%s1 + $0x5a8] sm:$0xf]
  %v402 = vld [vmem:[%s1 + $0x5ac] sm:$0xf]
  %v403 = vld [vmem:[%s1 + $0x5b0] sm:$0xf]
  %v404 = vld [vmem:[%s1 + $0x5b4] sm:$0xf]
  %v405 = vld [vmem:[%s1 + $0x5b8] sm:$0xf]
  %v406 = vld [vmem:[%s1 + $0x5bc] sm:$0xf]
  %v407 = vld [vmem:[%s1 + $0x5c0] sm:$0xf]
  %v408 = vld [vmem:[%s1 + $0x5c4] sm:$0xf]
  %v409 = vld [vmem:[%s1 + $0x5c8] sm:$0xf]
  %v410 = vld [vmem:[%s1 + $0x5cc] sm:$0xf]
  %v411 = vld [vmem:[%s1 + $0x5d0] sm:$0xf]
  %v412 = vld [vmem:[%s1 + $0x5d4] sm:$0xf]
  %v413 = vld [vmem:[%s1 + $0x5d8] sm:$0xf]
  %v414 = vld [vmem:[%s1 + $0x5dc] sm:$0xf]
  %v415 = vld [vmem:[%s1 + $0x5e0] sm:$0xf]
  %v416 = vld [vmem:[%s1 + $0x5e4] sm:$0xf]
  %v417 = vld [vmem:[%s1 + $0x5e8] sm:$0xf]
  %v418 = vld [vmem:[%s1 + $0x5ec] sm:$0xf]
  %v419 = vld [vmem:[%s1 + $0x5f0] sm:$0xf]
  %v420 = vld [vmem:[%s1 + $0x5f4] sm:$0xf]
  %v421 = vld [vmem:[%s1 + $0x5f8] sm:$0xf]
  %v422 = vld [vmem:[%s1 + $0x5fc] sm:$0xf]
  %v423 = vld [vmem:[%s2] sm:$0x1]
  %v425 = vlaneseq
  %v426 = vshrl.u32 %v425, 7
  %v427 = vsub.s32 0, %v426
  %v428 = vrot.slane %v423, %v427
  %v454 = vunpack.c.l.b16 %v15
  %v455 = vunpack.c.h.b16 %v15
  %v456 = vunpack.c.l.b16 %v16
  %v457 = vunpack.c.h.b16 %v16
  %v458 = vunpack.c.l.b16 %v17
  %v459 = vunpack.c.h.b16 %v17
  %v460 = vunpack.c.l.b16 %v18
  %v461 = vunpack.c.h.b16 %v18
  %v462 = vunpack.c.l.b16 %v19
  %v463 = vunpack.c.h.b16 %v19
  %v464 = vunpack.c.l.b16 %v20
  %v465 = vunpack.c.h.b16 %v20
  %v466 = vunpack.c.l.b16 %v21
  %v467 = vunpack.c.h.b16 %v21
  %v468 = vunpack.c.l.b16 %v22
  %v469 = vunpack.c.h.b16 %v22
  %v470 = vunpack.c.l.b16 %v23
  %v471 = vunpack.c.h.b16 %v23
  %v472 = vunpack.c.l.b16 %v24
  %v473 = vunpack.c.h.b16 %v24
  %v474 = vunpack.c.l.b16 %v25
  %v475 = vunpack.c.h.b16 %v25
  %v476 = vunpack.c.l.b16 %v26
  %v477 = vunpack.c.h.b16 %v26
  %v478 = vunpack.c.l.b16 %v27
  %v479 = vunpack.c.h.b16 %v27
  %v480 = vunpack.c.l.b16 %v28
  %v481 = vunpack.c.h.b16 %v28
  %v482 = vunpack.c.l.b16 %v29
  %v483 = vunpack.c.h.b16 %v29
  %v484 = vunpack.c.l.b16 %v30
  %v485 = vunpack.c.h.b16 %v30
  %v486 = vunpack.c.l.b16 %v31
  %v487 = vunpack.c.h.b16 %v31
  %v488 = vunpack.c.l.b16 %v32
  %v489 = vunpack.c.h.b16 %v32
  %v490 = vunpack.c.l.b16 %v33
  %v491 = vunpack.c.h.b16 %v33
  %v492 = vunpack.c.l.b16 %v34
  %v493 = vunpack.c.h.b16 %v34
  %v494 = vunpack.c.l.b16 %v35
  %v495 = vunpack.c.h.b16 %v35
  %v496 = vunpack.c.l.b16 %v36
  %v497 = vunpack.c.h.b16 %v36
  %v498 = vunpack.c.l.b16 %v37
  %v499 = vunpack.c.h.b16 %v37
  %v500 = vunpack.c.l.b16 %v38
  %v501 = vunpack.c.h.b16 %v38
  %v502 = vpack.c.b16 %v478, %v454
  %v503 = vpack.c.b16 %v479, %v455
  %v504 = vpack.c.b16 %v480, %v456
  %v505 = vpack.c.b16 %v481, %v457
  %v506 = vpack.c.b16 %v482, %v458
  %v507 = vpack.c.b16 %v483, %v459
  %v508 = vpack.c.b16 %v484, %v460
  %v509 = vpack.c.b16 %v485, %v461
  %v510 = vpack.c.b16 %v486, %v462
  %v511 = vpack.c.b16 %v487, %v463
  %v512 = vpack.c.b16 %v488, %v464
  %v513 = vpack.c.b16 %v489, %v465
  %v514 = vpack.c.b16 %v490, %v466
  %v515 = vpack.c.b16 %v491, %v467
  %v516 = vpack.c.b16 %v492, %v468
  %v517 = vpack.c.b16 %v493, %v469
  %v518 = vpack.c.b16 %v494, %v470
  %v519 = vpack.c.b16 %v495, %v471
  %v520 = vpack.c.b16 %v496, %v472
  %v521 = vpack.c.b16 %v497, %v473
  %v522 = vpack.c.b16 %v498, %v474
  %v523 = vpack.c.b16 %v499, %v475
  %v524 = vpack.c.b16 %v500, %v476
  %v525 = vpack.c.b16 %v501, %v477
  %v934 = vunpack.c.l.b16 %v39
  %v935 = vunpack.c.l.b16 %v40
  %v936 = vunpack.c.l.b16 %v41
  %v937 = vunpack.c.l.b16 %v42
  %v938 = vunpack.c.l.b16 %v43
  %v939 = vunpack.c.l.b16 %v44
  %v940 = vunpack.c.l.b16 %v45
  %v941 = vunpack.c.l.b16 %v46
  %v942 = vunpack.c.l.b16 %v47
  %v943 = vunpack.c.l.b16 %v48
  %v944 = vunpack.c.l.b16 %v49
  %v945 = vunpack.c.l.b16 %v50
  %v946 = vunpack.c.l.b16 %v51
  %v947 = vunpack.c.l.b16 %v52
  %v948 = vunpack.c.l.b16 %v53
  %v949 = vunpack.c.l.b16 %v54
  %v950 = vunpack.c.l.b16 %v55
  %v951 = vunpack.c.l.b16 %v56
  %v952 = vunpack.c.l.b16 %v57
  %v953 = vunpack.c.l.b16 %v58
  %v954 = vunpack.c.l.b16 %v59
  %v955 = vunpack.c.l.b16 %v60
  %v956 = vunpack.c.l.b16 %v61
  %v957 = vunpack.c.l.b16 %v62
  %v958 = vunpack.c.l.b16 %v63
  %v959 = vunpack.c.l.b16 %v64
  %v960 = vunpack.c.l.b16 %v65
  %v961 = vunpack.c.l.b16 %v66
  %v962 = vunpack.c.l.b16 %v67
  %v963 = vunpack.c.l.b16 %v68
  %v964 = vunpack.c.l.b16 %v69
  %v965 = vunpack.c.l.b16 %v70
  %v966 = vunpack.c.l.b16 %v71
  %v967 = vunpack.c.l.b16 %v72
  %v968 = vunpack.c.l.b16 %v73
  %v969 = vunpack.c.l.b16 %v74
  %v970 = vunpack.c.l.b16 %v75
  %v971 = vunpack.c.l.b16 %v76
  %v972 = vunpack.c.l.b16 %v77
  %v973 = vunpack.c.l.b16 %v78
  %v974 = vunpack.c.l.b16 %v79
  %v975 = vunpack.c.l.b16 %v80
  %v976 = vunpack.c.l.b16 %v81
  %v977 = vunpack.c.l.b16 %v82
  %v978 = vunpack.c.l.b16 %v83
  %v979 = vunpack.c.l.b16 %v84
  %v980 = vunpack.c.l.b16 %v85
  %v981 = vunpack.c.l.b16 %v86
  %v982 = vunpack.c.l.b16 %v87
  %v983 = vunpack.c.l.b16 %v88
  %v984 = vunpack.c.l.b16 %v89
  %v985 = vunpack.c.l.b16 %v90
  %v986 = vunpack.c.l.b16 %v91
  %v987 = vunpack.c.l.b16 %v92
  %v988 = vunpack.c.l.b16 %v93
  %v989 = vunpack.c.l.b16 %v94
  %v990 = vunpack.c.l.b16 %v95
  %v991 = vunpack.c.l.b16 %v96
  %v992 = vunpack.c.l.b16 %v97
  %v993 = vunpack.c.l.b16 %v98
  %v994 = vunpack.c.l.b16 %v99
  %v995 = vunpack.c.l.b16 %v100
  %v996 = vunpack.c.l.b16 %v101
  %v997 = vunpack.c.l.b16 %v102
  %v998 = vunpack.c.l.b16 %v103
  %v999 = vunpack.c.l.b16 %v104
  %v1000 = vunpack.c.l.b16 %v105
  %v1001 = vunpack.c.l.b16 %v106
  %v1002 = vunpack.c.l.b16 %v107
  %v1003 = vunpack.c.l.b16 %v108
  %v1004 = vunpack.c.l.b16 %v109
  %v1005 = vunpack.c.l.b16 %v110
  %v1006 = vunpack.c.l.b16 %v111
  %v1007 = vunpack.c.l.b16 %v112
  %v1008 = vunpack.c.l.b16 %v113
  %v1009 = vunpack.c.l.b16 %v114
  %v1010 = vunpack.c.l.b16 %v115
  %v1011 = vunpack.c.l.b16 %v116
  %v1012 = vunpack.c.l.b16 %v117
  %v1013 = vunpack.c.l.b16 %v118
  %v1014 = vunpack.c.l.b16 %v119
  %v1015 = vunpack.c.l.b16 %v120
  %v1016 = vunpack.c.l.b16 %v121
  %v1017 = vunpack.c.l.b16 %v122
  %v1018 = vunpack.c.l.b16 %v123
  %v1019 = vunpack.c.l.b16 %v124
  %v1020 = vunpack.c.l.b16 %v125
  %v1021 = vunpack.c.l.b16 %v126
  %v1022 = vunpack.c.l.b16 %v127
  %v1023 = vunpack.c.l.b16 %v128
  %v1024 = vunpack.c.l.b16 %v129
  %v1025 = vunpack.c.l.b16 %v130
  %v1026 = vunpack.c.l.b16 %v131
  %v1027 = vunpack.c.l.b16 %v132
  %v1028 = vunpack.c.l.b16 %v133
  %v1029 = vunpack.c.l.b16 %v134
  %v1030 = vunpack.c.l.b16 %v135
  %v1031 = vunpack.c.l.b16 %v136
  %v1032 = vunpack.c.l.b16 %v137
  %v1033 = vunpack.c.l.b16 %v138
  %v1034 = vunpack.c.l.b16 %v139
  %v1035 = vunpack.c.l.b16 %v140
  %v1036 = vunpack.c.l.b16 %v141
  %v1037 = vunpack.c.l.b16 %v142
  %v1038 = vunpack.c.l.b16 %v143
  %v1039 = vunpack.c.l.b16 %v144
  %v1040 = vunpack.c.l.b16 %v145
  %v1041 = vunpack.c.l.b16 %v146
  %v1042 = vunpack.c.l.b16 %v147
  %v1043 = vunpack.c.l.b16 %v148
  %v1044 = vunpack.c.l.b16 %v149
  %v1045 = vunpack.c.l.b16 %v150
  %v1046 = vunpack.c.l.b16 %v151
  %v1047 = vunpack.c.l.b16 %v152
  %v1048 = vunpack.c.l.b16 %v153
  %v1049 = vunpack.c.l.b16 %v154
  %v1050 = vunpack.c.l.b16 %v155
  %v1051 = vunpack.c.l.b16 %v156
  %v1052 = vunpack.c.l.b16 %v157
  %v1053 = vunpack.c.l.b16 %v158
  %v1054 = vunpack.c.l.b16 %v159
  %v1055 = vunpack.c.l.b16 %v160
  %v1056 = vunpack.c.l.b16 %v161
  %v1057 = vunpack.c.l.b16 %v162
  %v1058 = vunpack.c.l.b16 %v163
  %v1059 = vunpack.c.l.b16 %v164
  %v1060 = vunpack.c.l.b16 %v165
  %v1061 = vunpack.c.l.b16 %v166
  %v1062 = vunpack.c.l.b16 %v167
  %v1063 = vunpack.c.l.b16 %v168
  %v1064 = vunpack.c.l.b16 %v169
  %v1065 = vunpack.c.l.b16 %v170
  %v1066 = vunpack.c.l.b16 %v171
  %v1067 = vunpack.c.l.b16 %v172
  %v1068 = vunpack.c.l.b16 %v173
  %v1069 = vunpack.c.l.b16 %v174
  %v1070 = vunpack.c.l.b16 %v175
  %v1071 = vunpack.c.l.b16 %v176
  %v1072 = vunpack.c.l.b16 %v177
  %v1073 = vunpack.c.l.b16 %v178
  %v1074 = vunpack.c.l.b16 %v179
  %v1075 = vunpack.c.l.b16 %v180
  %v1076 = vunpack.c.l.b16 %v181
  %v1077 = vunpack.c.l.b16 %v182
  %v1078 = vunpack.c.l.b16 %v183
  %v1079 = vunpack.c.l.b16 %v184
  %v1080 = vunpack.c.l.b16 %v185
  %v1081 = vunpack.c.l.b16 %v186
  %v1082 = vunpack.c.l.b16 %v187
  %v1083 = vunpack.c.l.b16 %v188
  %v1084 = vunpack.c.l.b16 %v189
  %v1085 = vunpack.c.l.b16 %v190
  %v1086 = vunpack.c.l.b16 %v191
  %v1087 = vunpack.c.l.b16 %v192
  %v1088 = vunpack.c.l.b16 %v193
  %v1089 = vunpack.c.l.b16 %v194
  %v1090 = vunpack.c.l.b16 %v195
  %v1091 = vunpack.c.l.b16 %v196
  %v1092 = vunpack.c.l.b16 %v197
  %v1093 = vunpack.c.l.b16 %v198
  %v1094 = vunpack.c.l.b16 %v199
  %v1095 = vunpack.c.l.b16 %v200
  %v1096 = vunpack.c.l.b16 %v201
  %v1097 = vunpack.c.l.b16 %v202
  %v1098 = vunpack.c.l.b16 %v203
  %v1099 = vunpack.c.l.b16 %v204
  %v1100 = vunpack.c.l.b16 %v205
  %v1101 = vunpack.c.l.b16 %v206
  %v1102 = vunpack.c.l.b16 %v207
  %v1103 = vunpack.c.l.b16 %v208
  %v1104 = vunpack.c.l.b16 %v209
  %v1105 = vunpack.c.l.b16 %v210
  %v1106 = vunpack.c.l.b16 %v211
  %v1107 = vunpack.c.l.b16 %v212
  %v1108 = vunpack.c.l.b16 %v213
  %v1109 = vunpack.c.l.b16 %v214
  %v1110 = vunpack.c.l.b16 %v215
  %v1111 = vunpack.c.l.b16 %v216
  %v1112 = vunpack.c.l.b16 %v217
  %v1113 = vunpack.c.l.b16 %v218
  %v1114 = vunpack.c.l.b16 %v219
  %v1115 = vunpack.c.l.b16 %v220
  %v1116 = vunpack.c.l.b16 %v221
  %v1117 = vunpack.c.l.b16 %v222
  %v1118 = vunpack.c.l.b16 %v223
  %v1119 = vunpack.c.l.b16 %v224
  %v1120 = vunpack.c.l.b16 %v225
  %v1121 = vunpack.c.l.b16 %v226
  %v1122 = vunpack.c.l.b16 %v227
  %v1123 = vunpack.c.l.b16 %v228
  %v1124 = vunpack.c.l.b16 %v229
  %v1125 = vunpack.c.l.b16 %v230
  %v1126 = vunpack.c.l.b16 %v231
  %v1127 = vunpack.c.l.b16 %v232
  %v1128 = vunpack.c.l.b16 %v233
  %v1129 = vunpack.c.l.b16 %v234
  %v1130 = vunpack.c.l.b16 %v235
  %v1131 = vunpack.c.l.b16 %v236
  %v1132 = vunpack.c.l.b16 %v237
  %v1133 = vunpack.c.l.b16 %v238
  %v1134 = vunpack.c.l.b16 %v239
  %v1135 = vunpack.c.l.b16 %v240
  %v1136 = vunpack.c.l.b16 %v241
  %v1137 = vunpack.c.l.b16 %v242
  %v1138 = vunpack.c.l.b16 %v243
  %v1139 = vunpack.c.l.b16 %v244
  %v1140 = vunpack.c.l.b16 %v245
  %v1141 = vunpack.c.l.b16 %v246
  %v1142 = vunpack.c.l.b16 %v247
  %v1143 = vunpack.c.l.b16 %v248
  %v1144 = vunpack.c.l.b16 %v249
  %v1145 = vunpack.c.l.b16 %v250
  %v1146 = vunpack.c.l.b16 %v251
  %v1147 = vunpack.c.l.b16 %v252
  %v1148 = vunpack.c.l.b16 %v253
  %v1149 = vunpack.c.l.b16 %v254
  %v1150 = vunpack.c.l.b16 %v255
  %v1151 = vunpack.c.l.b16 %v256
  %v1152 = vunpack.c.l.b16 %v257
  %v1153 = vunpack.c.l.b16 %v258
  %v1154 = vunpack.c.l.b16 %v259
  %v1155 = vunpack.c.l.b16 %v260
  %v1156 = vunpack.c.l.b16 %v261
  %v1157 = vunpack.c.l.b16 %v262
  %v1158 = vunpack.c.l.b16 %v263
  %v1159 = vunpack.c.l.b16 %v264
  %v1160 = vunpack.c.l.b16 %v265
  %v1161 = vunpack.c.l.b16 %v266
  %v1162 = vunpack.c.l.b16 %v267
  %v1163 = vunpack.c.l.b16 %v268
  %v1164 = vunpack.c.l.b16 %v269
  %v1165 = vunpack.c.l.b16 %v270
  %v1166 = vunpack.c.l.b16 %v271
  %v1167 = vunpack.c.l.b16 %v272
  %v1168 = vunpack.c.l.b16 %v273
  %v1169 = vunpack.c.l.b16 %v274
  %v1170 = vunpack.c.l.b16 %v275
  %v1171 = vunpack.c.l.b16 %v276
  %v1172 = vunpack.c.l.b16 %v277
  %v1173 = vunpack.c.l.b16 %v278
  %v1174 = vunpack.c.l.b16 %v279
  %v1175 = vunpack.c.l.b16 %v280
  %v1176 = vunpack.c.l.b16 %v281
  %v1177 = vunpack.c.l.b16 %v282
  %v1178 = vunpack.c.l.b16 %v283
  %v1179 = vunpack.c.l.b16 %v284
  %v1180 = vunpack.c.l.b16 %v285
  %v1181 = vunpack.c.l.b16 %v286
  %v1182 = vunpack.c.l.b16 %v287
  %v1183 = vunpack.c.l.b16 %v288
  %v1184 = vunpack.c.l.b16 %v289
  %v1185 = vunpack.c.l.b16 %v290
  %v1186 = vunpack.c.l.b16 %v291
  %v1187 = vunpack.c.l.b16 %v292
  %v1188 = vunpack.c.l.b16 %v293
  %v1189 = vunpack.c.l.b16 %v294
  %v1190 = vunpack.c.l.b16 %v295
  %v1191 = vunpack.c.l.b16 %v296
  %v1192 = vunpack.c.l.b16 %v297
  %v1193 = vunpack.c.l.b16 %v298
  %v1194 = vunpack.c.l.b16 %v299
  %v1195 = vunpack.c.l.b16 %v300
  %v1196 = vunpack.c.l.b16 %v301
  %v1197 = vunpack.c.l.b16 %v302
  %v1198 = vunpack.c.l.b16 %v303
  %v1199 = vunpack.c.l.b16 %v304
  %v1200 = vunpack.c.l.b16 %v305
  %v1201 = vunpack.c.l.b16 %v306
  %v1202 = vunpack.c.l.b16 %v307
  %v1203 = vunpack.c.l.b16 %v308
  %v1204 = vunpack.c.l.b16 %v309
  %v1205 = vunpack.c.l.b16 %v310
  %v1206 = vunpack.c.l.b16 %v311
  %v1207 = vunpack.c.l.b16 %v312
  %v1208 = vunpack.c.l.b16 %v313
  %v1209 = vunpack.c.l.b16 %v314
  %v1210 = vunpack.c.l.b16 %v315
  %v1211 = vunpack.c.l.b16 %v316
  %v1212 = vunpack.c.l.b16 %v317
  %v1213 = vunpack.c.l.b16 %v318
  %v1214 = vunpack.c.l.b16 %v319
  %v1215 = vunpack.c.l.b16 %v320
  %v1216 = vunpack.c.l.b16 %v321
  %v1217 = vunpack.c.l.b16 %v322
  %v1218 = vunpack.c.l.b16 %v323
  %v1219 = vunpack.c.l.b16 %v324
  %v1220 = vunpack.c.l.b16 %v325
  %v1221 = vunpack.c.l.b16 %v326
  %v1222 = vunpack.c.l.b16 %v327
  %v1223 = vunpack.c.l.b16 %v328
  %v1224 = vunpack.c.l.b16 %v329
  %v1225 = vunpack.c.l.b16 %v330
  %v1226 = vunpack.c.l.b16 %v331
  %v1227 = vunpack.c.l.b16 %v332
  %v1228 = vunpack.c.l.b16 %v333
  %v1229 = vunpack.c.l.b16 %v334
  %v1230 = vunpack.c.l.b16 %v335
  %v1231 = vunpack.c.l.b16 %v336
  %v1232 = vunpack.c.l.b16 %v337
  %v1233 = vunpack.c.l.b16 %v338
  %v1234 = vunpack.c.l.b16 %v339
  %v1235 = vunpack.c.l.b16 %v340
  %v1236 = vunpack.c.l.b16 %v341
  %v1237 = vunpack.c.l.b16 %v342
  %v1238 = vunpack.c.l.b16 %v343
  %v1239 = vunpack.c.l.b16 %v344
  %v1240 = vunpack.c.l.b16 %v345
  %v1241 = vunpack.c.l.b16 %v346
  %v1242 = vunpack.c.l.b16 %v347
  %v1243 = vunpack.c.l.b16 %v348
  %v1244 = vunpack.c.l.b16 %v349
  %v1245 = vunpack.c.l.b16 %v350
  %v1246 = vunpack.c.l.b16 %v351
  %v1247 = vunpack.c.l.b16 %v352
  %v1248 = vunpack.c.l.b16 %v353
  %v1249 = vunpack.c.l.b16 %v354
  %v1250 = vunpack.c.l.b16 %v355
  %v1251 = vunpack.c.l.b16 %v356
  %v1252 = vunpack.c.l.b16 %v357
  %v1253 = vunpack.c.l.b16 %v358
  %v1254 = vunpack.c.l.b16 %v359
  %v1255 = vunpack.c.l.b16 %v360
  %v1256 = vunpack.c.l.b16 %v361
  %v1257 = vunpack.c.l.b16 %v362
  %v1258 = vunpack.c.l.b16 %v363
  %v1259 = vunpack.c.l.b16 %v364
  %v1260 = vunpack.c.l.b16 %v365
  %v1261 = vunpack.c.l.b16 %v366
  %v1262 = vunpack.c.l.b16 %v367
  %v1263 = vunpack.c.l.b16 %v368
  %v1264 = vunpack.c.l.b16 %v369
  %v1265 = vunpack.c.l.b16 %v370
  %v1266 = vunpack.c.l.b16 %v371
  %v1267 = vunpack.c.l.b16 %v372
  %v1268 = vunpack.c.l.b16 %v373
  %v1269 = vunpack.c.l.b16 %v374
  %v1270 = vunpack.c.l.b16 %v375
  %v1271 = vunpack.c.l.b16 %v376
  %v1272 = vunpack.c.l.b16 %v377
  %v1273 = vunpack.c.l.b16 %v378
  %v1274 = vunpack.c.l.b16 %v379
  %v1275 = vunpack.c.l.b16 %v380
  %v1276 = vunpack.c.l.b16 %v381
  %v1277 = vunpack.c.l.b16 %v382
  %v1278 = vunpack.c.l.b16 %v383
  %v1279 = vunpack.c.l.b16 %v384
  %v1280 = vunpack.c.l.b16 %v385
  %v1281 = vunpack.c.l.b16 %v386
  %v1282 = vunpack.c.l.b16 %v387
  %v1283 = vunpack.c.l.b16 %v388
  %v1284 = vunpack.c.l.b16 %v389
  %v1285 = vunpack.c.l.b16 %v390
  %v1286 = vunpack.c.l.b16 %v391
  %v1287 = vunpack.c.l.b16 %v392
  %v1288 = vunpack.c.l.b16 %v393
  %v1289 = vunpack.c.l.b16 %v394
  %v1290 = vunpack.c.l.b16 %v395
  %v1291 = vunpack.c.l.b16 %v396
  %v1292 = vunpack.c.l.b16 %v397
  %v1293 = vunpack.c.l.b16 %v398
  %v1294 = vunpack.c.l.b16 %v399
  %v1295 = vunpack.c.l.b16 %v400
  %v1296 = vunpack.c.l.b16 %v401
  %v1297 = vunpack.c.l.b16 %v402
  %v1298 = vunpack.c.l.b16 %v403
  %v1299 = vunpack.c.l.b16 %v404
  %v1300 = vunpack.c.l.b16 %v405
  %v1301 = vunpack.c.l.b16 %v406
  %v1302 = vunpack.c.l.b16 %v407
  %v1303 = vunpack.c.l.b16 %v408
  %v1304 = vunpack.c.l.b16 %v409
  %v1305 = vunpack.c.l.b16 %v410
  %v1306 = vunpack.c.l.b16 %v411
  %v1307 = vunpack.c.l.b16 %v412
  %v1308 = vunpack.c.l.b16 %v413
  %v1309 = vunpack.c.l.b16 %v414
  %v1310 = vunpack.c.l.b16 %v415
  %v1311 = vunpack.c.l.b16 %v416
  %v1312 = vunpack.c.l.b16 %v417
  %v1313 = vunpack.c.l.b16 %v418
  %v1314 = vunpack.c.l.b16 %v419
  %v1315 = vunpack.c.l.b16 %v420
  %v1316 = vunpack.c.l.b16 %v421
  %v1317 = vunpack.c.l.b16 %v422
  %v1318 = vpack.c.b16 %v935, %v934
  %v1319 = vpack.c.b16 %v937, %v936
  %v1320 = vpack.c.b16 %v939, %v938
  %v1321 = vpack.c.b16 %v941, %v940
  %v1322 = vpack.c.b16 %v943, %v942
  %v1323 = vpack.c.b16 %v945, %v944
  %v1324 = vpack.c.b16 %v947, %v946
  %v1325 = vpack.c.b16 %v949, %v948
  %v1326 = vpack.c.b16 %v951, %v950
  %v1327 = vpack.c.b16 %v953, %v952
  %v1328 = vpack.c.b16 %v955, %v954
  %v1329 = vpack.c.b16 %v957, %v956
  %v1330 = vpack.c.b16 %v959, %v958
  %v1331 = vpack.c.b16 %v961, %v960
  %v1332 = vpack.c.b16 %v963, %v962
  %v1333 = vpack.c.b16 %v965, %v964
  %v1334 = vpack.c.b16 %v967, %v966
  %v1335 = vpack.c.b16 %v969, %v968
  %v1336 = vpack.c.b16 %v971, %v970
  %v1337 = vpack.c.b16 %v973, %v972
  %v1338 = vpack.c.b16 %v975, %v974
  %v1339 = vpack.c.b16 %v977, %v976
  %v1340 = vpack.c.b16 %v979, %v978
  %v1341 = vpack.c.b16 %v981, %v980
  %v1342 = vpack.c.b16 %v983, %v982
  %v1343 = vpack.c.b16 %v985, %v984
  %v1344 = vpack.c.b16 %v987, %v986
  %v1345 = vpack.c.b16 %v989, %v988
  %v1346 = vpack.c.b16 %v991, %v990
  %v1347 = vpack.c.b16 %v993, %v992
  %v1348 = vpack.c.b16 %v995, %v994
  %v1349 = vpack.c.b16 %v997, %v996
  %v1350 = vpack.c.b16 %v999, %v998
  %v1351 = vpack.c.b16 %v1001, %v1000
  %v1352 = vpack.c.b16 %v1003, %v1002
  %v1353 = vpack.c.b16 %v1005, %v1004
  %v1354 = vpack.c.b16 %v1007, %v1006
  %v1355 = vpack.c.b16 %v1009, %v1008
  %v1356 = vpack.c.b16 %v1011, %v1010
  %v1357 = vpack.c.b16 %v1013, %v1012
  %v1358 = vpack.c.b16 %v1015, %v1014
  %v1359 = vpack.c.b16 %v1017, %v1016
  %v1360 = vpack.c.b16 %v1019, %v1018
  %v1361 = vpack.c.b16 %v1021, %v1020
  %v1362 = vpack.c.b16 %v1023, %v1022
  %v1363 = vpack.c.b16 %v1025, %v1024
  %v1364 = vpack.c.b16 %v1027, %v1026
  %v1365 = vpack.c.b16 %v1029, %v1028
  %v1366 = vpack.c.b16 %v1031, %v1030
  %v1367 = vpack.c.b16 %v1033, %v1032
  %v1368 = vpack.c.b16 %v1035, %v1034
  %v1369 = vpack.c.b16 %v1037, %v1036
  %v1370 = vpack.c.b16 %v1039, %v1038
  %v1371 = vpack.c.b16 %v1041, %v1040
  %v1372 = vpack.c.b16 %v1043, %v1042
  %v1373 = vpack.c.b16 %v1045, %v1044
  %v1374 = vpack.c.b16 %v1047, %v1046
  %v1375 = vpack.c.b16 %v1049, %v1048
  %v1376 = vpack.c.b16 %v1051, %v1050
  %v1377 = vpack.c.b16 %v1053, %v1052
  %v1378 = vpack.c.b16 %v1055, %v1054
  %v1379 = vpack.c.b16 %v1057, %v1056
  %v1380 = vpack.c.b16 %v1059, %v1058
  %v1381 = vpack.c.b16 %v1061, %v1060
  %v1382 = vpack.c.b16 %v1063, %v1062
  %v1383 = vpack.c.b16 %v1065, %v1064
  %v1384 = vpack.c.b16 %v1067, %v1066
  %v1385 = vpack.c.b16 %v1069, %v1068
  %v1386 = vpack.c.b16 %v1071, %v1070
  %v1387 = vpack.c.b16 %v1073, %v1072
  %v1388 = vpack.c.b16 %v1075, %v1074
  %v1389 = vpack.c.b16 %v1077, %v1076
  %v1390 = vpack.c.b16 %v1079, %v1078
  %v1391 = vpack.c.b16 %v1081, %v1080
  %v1392 = vpack.c.b16 %v1083, %v1082
  %v1393 = vpack.c.b16 %v1085, %v1084
  %v1394 = vpack.c.b16 %v1087, %v1086
  %v1395 = vpack.c.b16 %v1089, %v1088
  %v1396 = vpack.c.b16 %v1091, %v1090
  %v1397 = vpack.c.b16 %v1093, %v1092
  %v1398 = vpack.c.b16 %v1095, %v1094
  %v1399 = vpack.c.b16 %v1097, %v1096
  %v1400 = vpack.c.b16 %v1099, %v1098
  %v1401 = vpack.c.b16 %v1101, %v1100
  %v1402 = vpack.c.b16 %v1103, %v1102
  %v1403 = vpack.c.b16 %v1105, %v1104
  %v1404 = vpack.c.b16 %v1107, %v1106
  %v1405 = vpack.c.b16 %v1109, %v1108
  %v1406 = vpack.c.b16 %v1111, %v1110
  %v1407 = vpack.c.b16 %v1113, %v1112
  %v1408 = vpack.c.b16 %v1115, %v1114
  %v1409 = vpack.c.b16 %v1117, %v1116
  %v1410 = vpack.c.b16 %v1119, %v1118
  %v1411 = vpack.c.b16 %v1121, %v1120
  %v1412 = vpack.c.b16 %v1123, %v1122
  %v1413 = vpack.c.b16 %v1125, %v1124
  %v1414 = vpack.c.b16 %v1127, %v1126
  %v1415 = vpack.c.b16 %v1129, %v1128
  %v1416 = vpack.c.b16 %v1131, %v1130
  %v1417 = vpack.c.b16 %v1133, %v1132
  %v1418 = vpack.c.b16 %v1135, %v1134
  %v1419 = vpack.c.b16 %v1137, %v1136
  %v1420 = vpack.c.b16 %v1139, %v1138
  %v1421 = vpack.c.b16 %v1141, %v1140
  %v1422 = vpack.c.b16 %v1143, %v1142
  %v1423 = vpack.c.b16 %v1145, %v1144
  %v1424 = vpack.c.b16 %v1147, %v1146
  %v1425 = vpack.c.b16 %v1149, %v1148
  %v1426 = vpack.c.b16 %v1151, %v1150
  %v1427 = vpack.c.b16 %v1153, %v1152
  %v1428 = vpack.c.b16 %v1155, %v1154
  %v1429 = vpack.c.b16 %v1157, %v1156
  %v1430 = vpack.c.b16 %v1159, %v1158
  %v1431 = vpack.c.b16 %v1161, %v1160
  %v1432 = vpack.c.b16 %v1163, %v1162
  %v1433 = vpack.c.b16 %v1165, %v1164
  %v1434 = vpack.c.b16 %v1167, %v1166
  %v1435 = vpack.c.b16 %v1169, %v1168
  %v1436 = vpack.c.b16 %v1171, %v1170
  %v1437 = vpack.c.b16 %v1173, %v1172
  %v1438 = vpack.c.b16 %v1175, %v1174
  %v1439 = vpack.c.b16 %v1177, %v1176
  %v1440 = vpack.c.b16 %v1179, %v1178
  %v1441 = vpack.c.b16 %v1181, %v1180
  %v1442 = vpack.c.b16 %v1183, %v1182
  %v1443 = vpack.c.b16 %v1185, %v1184
  %v1444 = vpack.c.b16 %v1187, %v1186
  %v1445 = vpack.c.b16 %v1189, %v1188
  %v1446 = vpack.c.b16 %v1191, %v1190
  %v1447 = vpack.c.b16 %v1193, %v1192
  %v1448 = vpack.c.b16 %v1195, %v1194
  %v1449 = vpack.c.b16 %v1197, %v1196
  %v1450 = vpack.c.b16 %v1199, %v1198
  %v1451 = vpack.c.b16 %v1201, %v1200
  %v1452 = vpack.c.b16 %v1203, %v1202
  %v1453 = vpack.c.b16 %v1205, %v1204
  %v1454 = vpack.c.b16 %v1207, %v1206
  %v1455 = vpack.c.b16 %v1209, %v1208
  %v1456 = vpack.c.b16 %v1211, %v1210
  %v1457 = vpack.c.b16 %v1213, %v1212
  %v1458 = vpack.c.b16 %v1215, %v1214
  %v1459 = vpack.c.b16 %v1217, %v1216
  %v1460 = vpack.c.b16 %v1219, %v1218
  %v1461 = vpack.c.b16 %v1221, %v1220
  %v1462 = vpack.c.b16 %v1223, %v1222
  %v1463 = vpack.c.b16 %v1225, %v1224
  %v1464 = vpack.c.b16 %v1227, %v1226
  %v1465 = vpack.c.b16 %v1229, %v1228
  %v1466 = vpack.c.b16 %v1231, %v1230
  %v1467 = vpack.c.b16 %v1233, %v1232
  %v1468 = vpack.c.b16 %v1235, %v1234
  %v1469 = vpack.c.b16 %v1237, %v1236
  %v1470 = vpack.c.b16 %v1239, %v1238
  %v1471 = vpack.c.b16 %v1241, %v1240
  %v1472 = vpack.c.b16 %v1243, %v1242
  %v1473 = vpack.c.b16 %v1245, %v1244
  %v1474 = vpack.c.b16 %v1247, %v1246
  %v1475 = vpack.c.b16 %v1249, %v1248
  %v1476 = vpack.c.b16 %v1251, %v1250
  %v1477 = vpack.c.b16 %v1253, %v1252
  %v1478 = vpack.c.b16 %v1255, %v1254
  %v1479 = vpack.c.b16 %v1257, %v1256
  %v1480 = vpack.c.b16 %v1259, %v1258
  %v1481 = vpack.c.b16 %v1261, %v1260
  %v1482 = vpack.c.b16 %v1263, %v1262
  %v1483 = vpack.c.b16 %v1265, %v1264
  %v1484 = vpack.c.b16 %v1267, %v1266
  %v1485 = vpack.c.b16 %v1269, %v1268
  %v1486 = vpack.c.b16 %v1271, %v1270
  %v1487 = vpack.c.b16 %v1273, %v1272
  %v1488 = vpack.c.b16 %v1275, %v1274
  %v1489 = vpack.c.b16 %v1277, %v1276
  %v1490 = vpack.c.b16 %v1279, %v1278
  %v1491 = vpack.c.b16 %v1281, %v1280
  %v1492 = vpack.c.b16 %v1283, %v1282
  %v1493 = vpack.c.b16 %v1285, %v1284
  %v1494 = vpack.c.b16 %v1287, %v1286
  %v1495 = vpack.c.b16 %v1289, %v1288
  %v1496 = vpack.c.b16 %v1291, %v1290
  %v1497 = vpack.c.b16 %v1293, %v1292
  %v1498 = vpack.c.b16 %v1295, %v1294
  %v1499 = vpack.c.b16 %v1297, %v1296
  %v1500 = vpack.c.b16 %v1299, %v1298
  %v1501 = vpack.c.b16 %v1301, %v1300
  %v1502 = vpack.c.b16 %v1303, %v1302
  %v1503 = vpack.c.b16 %v1305, %v1304
  %v1504 = vpack.c.b16 %v1307, %v1306
  %v1505 = vpack.c.b16 %v1309, %v1308
  %v1506 = vpack.c.b16 %v1311, %v1310
  %v1507 = vpack.c.b16 %v1313, %v1312
  %v1508 = vpack.c.b16 %v1315, %v1314
  %v1509 = vpack.c.b16 %v1317, %v1316
  %1702 = vmatprep.subr.bf16.mxu0 0
  %1703 = vmatpush1.bf16.msra.mxu0 %v1325
  %1704 = vmatprep.subr.bf16.mxu0 0
  %1705 = vmatpush1.bf16.msra.mxu0 %v1324
  %1706 = vmatprep.subr.bf16.mxu0 0
  %1707 = vmatpush1.bf16.msra.mxu0 %v1323
  %1708 = vmatprep.subr.bf16.mxu0 0
  %1709 = vmatpush1.bf16.msra.mxu0 %v1322
  %1710 = vmatprep.subr.bf16.mxu0 0
  %1711 = vmatpush1.bf16.msra.mxu0 %v1321
  %1712 = vmatprep.subr.bf16.mxu0 0
  %1713 = vmatpush1.bf16.msra.mxu0 %v1320
  %1714 = vmatprep.subr.bf16.mxu0 0
  %1715 = vmatpush1.bf16.msra.mxu0 %v1319
  %1716 = vmatprep.subr.bf16.mxu0 0
  %1717 = vmatpush1.bf16.msra.mxu0 %v1318
  %1718 = vmatprep.subr.bf16.mxu0 0
  %1719 = vmatpush2.bf16.msra.mxu0 %v1333
  %1720 = vmatprep.subr.bf16.mxu0 0
  %1721 = vmatpush2.bf16.msra.mxu0 %v1332
  %1722 = vmatprep.subr.bf16.mxu0 0
  %1723 = vmatpush2.bf16.msra.mxu0 %v1331
  %1724 = vmatprep.subr.bf16.mxu0 0
  %1725 = vmatpush2.bf16.msra.mxu0 %v1330
  %1726 = vmatprep.subr.bf16.mxu0 0
  %1727 = vmatpush2.bf16.msra.mxu0 %v1329
  %1728 = vmatprep.subr.bf16.mxu0 0
  %1729 = vmatpush2.bf16.msra.mxu0 %v1328
  %1730 = vmatprep.subr.bf16.mxu0 0
  %1731 = vmatpush2.bf16.msra.mxu0 %v1327
  %1732 = vmatprep.subr.bf16.mxu0 0
  %1733 = vmatpush2.bf16.msra.mxu0 %v1326
  %1734 = vmatprep.mubr.bf16.mxu0 %v503
  %1735 = vmatmul.mubr.bf16.gmra.mxu0 %v502
  %v1736 = vpop.f32.mrf.mxu0
  %v1737 = vadd.f32 %v428, %v1736
  %v1738 = vpop.f32.mrf.mxu0
  %v1739 = vpop.f32.mrf.mxu0
  %v1740 = vadd.f32 %v428, %v1739
  %v1741 = vpop.f32.mrf.mxu0
  %1742 = vdwg.mxu0
  %1743 = vmatprep.subr.bf16.mxu0 0
  %1744 = vmatpush1.bf16.msra.mxu0 %v1341
  %1745 = vmatprep.subr.bf16.mxu0 0
  %1746 = vmatpush1.bf16.msra.mxu0 %v1340
  %1747 = vmatprep.subr.bf16.mxu0 0
  %1748 = vmatpush1.bf16.msra.mxu0 %v1339
  %1749 = vmatprep.subr.bf16.mxu0 0
  %1750 = vmatpush1.bf16.msra.mxu0 %v1338
  %1751 = vmatprep.subr.bf16.mxu0 0
  %1752 = vmatpush1.bf16.msra.mxu0 %v1337
  %1753 = vmatprep.subr.bf16.mxu0 0
  %1754 = vmatpush1.bf16.msra.mxu0 %v1336
  %1755 = vmatprep.subr.bf16.mxu0 0
  %1756 = vmatpush1.bf16.msra.mxu0 %v1335
  %1757 = vmatprep.subr.bf16.mxu0 0
  %1758 = vmatpush1.bf16.msra.mxu0 %v1334
  %1759 = vmatprep.subr.bf16.mxu0 0
  %1760 = vmatpush2.bf16.msra.mxu0 %v1349
  %1761 = vmatprep.subr.bf16.mxu0 0
  %1762 = vmatpush2.bf16.msra.mxu0 %v1348
  %1763 = vmatprep.subr.bf16.mxu0 0
  %1764 = vmatpush2.bf16.msra.mxu0 %v1347
  %1765 = vmatprep.subr.bf16.mxu0 0
  %1766 = vmatpush2.bf16.msra.mxu0 %v1346
  %1767 = vmatprep.subr.bf16.mxu0 0
  %1768 = vmatpush2.bf16.msra.mxu0 %v1345
  %1769 = vmatprep.subr.bf16.mxu0 0
  %1770 = vmatpush2.bf16.msra.mxu0 %v1344
  %1771 = vmatprep.subr.bf16.mxu0 0
  %1772 = vmatpush2.bf16.msra.mxu0 %v1343
  %1773 = vmatprep.subr.bf16.mxu0 0
  %1774 = vmatpush2.bf16.msra.mxu0 %v1342
  %1775 = vmatprep.mubr.bf16.mxu0 %v505
  %1776 = vmatmul.mubr.bf16.gmra.mxu0 %v504
  %v1777 = vpop.f32.mrf.mxu0
  %v1778 = vadd.f32 %v1737, %v1777
  %v1779 = vpop.f32.mrf.mxu0
  %v1780 = vpop.f32.mrf.mxu0
  %v1781 = vadd.f32 %v1740, %v1780
  %v1782 = vpop.f32.mrf.mxu0
  %1783 = vdwg.mxu0
  %1784 = vmatprep.subr.bf16.mxu0 0
  %1785 = vmatpush1.bf16.msra.mxu0 %v1357
  %1786 = vmatprep.subr.bf16.mxu0 0
  %1787 = vmatpush1.bf16.msra.mxu0 %v1356
  %1788 = vmatprep.subr.bf16.mxu0 0
  %1789 = vmatpush1.bf16.msra.mxu0 %v1355
  %1790 = vmatprep.subr.bf16.mxu0 0
  %1791 = vmatpush1.bf16.msra.mxu0 %v1354
  %1792 = vmatprep.subr.bf16.mxu0 0
  %1793 = vmatpush1.bf16.msra.mxu0 %v1353
  %1794 = vmatprep.subr.bf16.mxu0 0
  %1795 = vmatpush1.bf16.msra.mxu0 %v1352
  %1796 = vmatprep.subr.bf16.mxu0 0
  %1797 = vmatpush1.bf16.msra.mxu0 %v1351
  %1798 = vmatprep.subr.bf16.mxu0 0
  %1799 = vmatpush1.bf16.msra.mxu0 %v1350
  %1800 = vmatprep.subr.bf16.mxu0 0
  %1801 = vmatpush2.bf16.msra.mxu0 %v1365
  %1802 = vmatprep.subr.bf16.mxu0 0
  %1803 = vmatpush2.bf16.msra.mxu0 %v1364
  %1804 = vmatprep.subr.bf16.mxu0 0
  %1805 = vmatpush2.bf16.msra.mxu0 %v1363
  %1806 = vmatprep.subr.bf16.mxu0 0
  %1807 = vmatpush2.bf16.msra.mxu0 %v1362
  %1808 = vmatprep.subr.bf16.mxu0 0
  %1809 = vmatpush2.bf16.msra.mxu0 %v1361
  %1810 = vmatprep.subr.bf16.mxu0 0
  %1811 = vmatpush2.bf16.msra.mxu0 %v1360
  %1812 = vmatprep.subr.bf16.mxu0 0
  %1813 = vmatpush2.bf16.msra.mxu0 %v1359
  %1814 = vmatprep.subr.bf16.mxu0 0
  %1815 = vmatpush2.bf16.msra.mxu0 %v1358
  %1816 = vmatprep.mubr.bf16.mxu0 %v507
  %1817 = vmatmul.mubr.bf16.gmra.mxu0 %v506
  %v1818 = vpop.f32.mrf.mxu0
  %v1819 = vadd.f32 %v1778, %v1818
  %v1820 = vpop.f32.mrf.mxu0
  %v1821 = vpop.f32.mrf.mxu0
  %v1822 = vadd.f32 %v1781, %v1821
  %v1823 = vpop.f32.mrf.mxu0
  %1824 = vdwg.mxu0
  %1825 = vmatprep.subr.bf16.mxu0 0
  %1826 = vmatpush1.bf16.msra.mxu0 %v1373
  %1827 = vmatprep.subr.bf16.mxu0 0
  %1828 = vmatpush1.bf16.msra.mxu0 %v1372
  %1829 = vmatprep.subr.bf16.mxu0 0
  %1830 = vmatpush1.bf16.msra.mxu0 %v1371
  %1831 = vmatprep.subr.bf16.mxu0 0
  %1832 = vmatpush1.bf16.msra.mxu0 %v1370
  %1833 = vmatprep.subr.bf16.mxu0 0
  %1834 = vmatpush1.bf16.msra.mxu0 %v1369
  %1835 = vmatprep.subr.bf16.mxu0 0
  %1836 = vmatpush1.bf16.msra.mxu0 %v1368
  %1837 = vmatprep.subr.bf16.mxu0 0
  %1838 = vmatpush1.bf16.msra.mxu0 %v1367
  %1839 = vmatprep.subr.bf16.mxu0 0
  %1840 = vmatpush1.bf16.msra.mxu0 %v1366
  %1841 = vmatprep.subr.bf16.mxu0 0
  %1842 = vmatpush2.bf16.msra.mxu0 %v1381
  %1843 = vmatprep.subr.bf16.mxu0 0
  %1844 = vmatpush2.bf16.msra.mxu0 %v1380
  %1845 = vmatprep.subr.bf16.mxu0 0
  %1846 = vmatpush2.bf16.msra.mxu0 %v1379
  %1847 = vmatprep.subr.bf16.mxu0 0
  %1848 = vmatpush2.bf16.msra.mxu0 %v1378
  %1849 = vmatprep.subr.bf16.mxu0 0
  %1850 = vmatpush2.bf16.msra.mxu0 %v1377
  %1851 = vmatprep.subr.bf16.mxu0 0
  %1852 = vmatpush2.bf16.msra.mxu0 %v1376
  %1853 = vmatprep.subr.bf16.mxu0 0
  %1854 = vmatpush2.bf16.msra.mxu0 %v1375
  %1855 = vmatprep.subr.bf16.mxu0 0
  %1856 = vmatpush2.bf16.msra.mxu0 %v1374
  %1857 = vmatprep.mubr.bf16.mxu0 %v509
  %1858 = vmatmul.mubr.bf16.gmra.mxu0 %v508
  %v1859 = vpop.f32.mrf.mxu0
  %v1860 = vadd.f32 %v1819, %v1859
  %v1861 = vpop.f32.mrf.mxu0
  %v1862 = vpop.f32.mrf.mxu0
  %v1863 = vadd.f32 %v1822, %v1862
  %v1864 = vpop.f32.mrf.mxu0
  %1865 = vdwg.mxu0
  %1866 = vmatprep.subr.bf16.mxu0 0
  %1867 = vmatpush1.bf16.msra.mxu0 %v1389
  %1868 = vmatprep.subr.bf16.mxu0 0
  %1869 = vmatpush1.bf16.msra.mxu0 %v1388
  %1870 = vmatprep.subr.bf16.mxu0 0
  %1871 = vmatpush1.bf16.msra.mxu0 %v1387
  %1872 = vmatprep.subr.bf16.mxu0 0
  %1873 = vmatpush1.bf16.msra.mxu0 %v1386
  %1874 = vmatprep.subr.bf16.mxu0 0
  %1875 = vmatpush1.bf16.msra.mxu0 %v1385
  %1876 = vmatprep.subr.bf16.mxu0 0
  %1877 = vmatpush1.bf16.msra.mxu0 %v1384
  %1878 = vmatprep.subr.bf16.mxu0 0
  %1879 = vmatpush1.bf16.msra.mxu0 %v1383
  %1880 = vmatprep.subr.bf16.mxu0 0
  %1881 = vmatpush1.bf16.msra.mxu0 %v1382
  %1882 = vmatprep.subr.bf16.mxu0 0
  %1883 = vmatpush2.bf16.msra.mxu0 %v1397
  %1884 = vmatprep.subr.bf16.mxu0 0
  %1885 = vmatpush2.bf16.msra.mxu0 %v1396
  %1886 = vmatprep.subr.bf16.mxu0 0
  %1887 = vmatpush2.bf16.msra.mxu0 %v1395
  %1888 = vmatprep.subr.bf16.mxu0 0
  %1889 = vmatpush2.bf16.msra.mxu0 %v1394
  %1890 = vmatprep.subr.bf16.mxu0 0
  %1891 = vmatpush2.bf16.msra.mxu0 %v1393
  %1892 = vmatprep.subr.bf16.mxu0 0
  %1893 = vmatpush2.bf16.msra.mxu0 %v1392
  %1894 = vmatprep.subr.bf16.mxu0 0
  %1895 = vmatpush2.bf16.msra.mxu0 %v1391
  %1896 = vmatprep.subr.bf16.mxu0 0
  %1897 = vmatpush2.bf16.msra.mxu0 %v1390
  %1898 = vmatprep.mubr.bf16.mxu0 %v511
  %1899 = vmatmul.mubr.bf16.gmra.mxu0 %v510
  %v1900 = vpop.f32.mrf.mxu0
  %v1901 = vadd.f32 %v1860, %v1900
  %v1902 = vpop.f32.mrf.mxu0
  %v1903 = vpop.f32.mrf.mxu0
  %v1904 = vadd.f32 %v1863, %v1903
  %v1905 = vpop.f32.mrf.mxu0
  %1906 = vdwg.mxu0
  %1907 = vmatprep.subr.bf16.mxu0 0
  %1908 = vmatpush1.bf16.msra.mxu0 %v1405
  %1909 = vmatprep.subr.bf16.mxu0 0
  %1910 = vmatpush1.bf16.msra.mxu0 %v1404
  %1911 = vmatprep.subr.bf16.mxu0 0
  %1912 = vmatpush1.bf16.msra.mxu0 %v1403
  %1913 = vmatprep.subr.bf16.mxu0 0
  %1914 = vmatpush1.bf16.msra.mxu0 %v1402
  %1915 = vmatprep.subr.bf16.mxu0 0
  %1916 = vmatpush1.bf16.msra.mxu0 %v1401
  %1917 = vmatprep.subr.bf16.mxu0 0
  %1918 = vmatpush1.bf16.msra.mxu0 %v1400
  %1919 = vmatprep.subr.bf16.mxu0 0
  %1920 = vmatpush1.bf16.msra.mxu0 %v1399
  %1921 = vmatprep.subr.bf16.mxu0 0
  %1922 = vmatpush1.bf16.msra.mxu0 %v1398
  %1923 = vmatprep.subr.bf16.mxu0 0
  %1924 = vmatpush2.bf16.msra.mxu0 %v1413
  %1925 = vmatprep.subr.bf16.mxu0 0
  %1926 = vmatpush2.bf16.msra.mxu0 %v1412
  %1927 = vmatprep.subr.bf16.mxu0 0
  %1928 = vmatpush2.bf16.msra.mxu0 %v1411
  %1929 = vmatprep.subr.bf16.mxu0 0
  %1930 = vmatpush2.bf16.msra.mxu0 %v1410
  %1931 = vmatprep.subr.bf16.mxu0 0
  %1932 = vmatpush2.bf16.msra.mxu0 %v1409
  %1933 = vmatprep.subr.bf16.mxu0 0
  %1934 = vmatpush2.bf16.msra.mxu0 %v1408
  %1935 = vmatprep.subr.bf16.mxu0 0
  %1936 = vmatpush2.bf16.msra.mxu0 %v1407
  %1937 = vmatprep.subr.bf16.mxu0 0
  %1938 = vmatpush2.bf16.msra.mxu0 %v1406
  %1939 = vmatprep.mubr.bf16.mxu0 %v513
  %1940 = vmatmul.mubr.bf16.gmra.mxu0 %v512
  %v1941 = vpop.f32.mrf.mxu0
  %v1942 = vadd.f32 %v1901, %v1941
  %v1943 = vpop.f32.mrf.mxu0
  %v1944 = vpop.f32.mrf.mxu0
  %v1945 = vadd.f32 %v1904, %v1944
  %v1946 = vpop.f32.mrf.mxu0
  %1947 = vdwg.mxu0
  %1948 = vmatprep.subr.bf16.mxu0 0
  %1949 = vmatpush1.bf16.msra.mxu0 %v1421
  %1950 = vmatprep.subr.bf16.mxu0 0
  %1951 = vmatpush1.bf16.msra.mxu0 %v1420
  %1952 = vmatprep.subr.bf16.mxu0 0
  %1953 = vmatpush1.bf16.msra.mxu0 %v1419
  %1954 = vmatprep.subr.bf16.mxu0 0
  %1955 = vmatpush1.bf16.msra.mxu0 %v1418
  %1956 = vmatprep.subr.bf16.mxu0 0
  %1957 = vmatpush1.bf16.msra.mxu0 %v1417
  %1958 = vmatprep.subr.bf16.mxu0 0
  %1959 = vmatpush1.bf16.msra.mxu0 %v1416
  %1960 = vmatprep.subr.bf16.mxu0 0
  %1961 = vmatpush1.bf16.msra.mxu0 %v1415
  %1962 = vmatprep.subr.bf16.mxu0 0
  %1963 = vmatpush1.bf16.msra.mxu0 %v1414
  %1964 = vmatprep.subr.bf16.mxu0 0
  %1965 = vmatpush2.bf16.msra.mxu0 %v1429
  %1966 = vmatprep.subr.bf16.mxu0 0
  %1967 = vmatpush2.bf16.msra.mxu0 %v1428
  %1968 = vmatprep.subr.bf16.mxu0 0
  %1969 = vmatpush2.bf16.msra.mxu0 %v1427
  %1970 = vmatprep.subr.bf16.mxu0 0
  %1971 = vmatpush2.bf16.msra.mxu0 %v1426
  %1972 = vmatprep.subr.bf16.mxu0 0
  %1973 = vmatpush2.bf16.msra.mxu0 %v1425
  %1974 = vmatprep.subr.bf16.mxu0 0
  %1975 = vmatpush2.bf16.msra.mxu0 %v1424
  %1976 = vmatprep.subr.bf16.mxu0 0
  %1977 = vmatpush2.bf16.msra.mxu0 %v1423
  %1978 = vmatprep.subr.bf16.mxu0 0
  %1979 = vmatpush2.bf16.msra.mxu0 %v1422
  %1980 = vmatprep.mubr.bf16.mxu0 %v515
  %1981 = vmatmul.mubr.bf16.gmra.mxu0 %v514
  %v1982 = vpop.f32.mrf.mxu0
  %v1983 = vadd.f32 %v1942, %v1982
  %v1984 = vpop.f32.mrf.mxu0
  %v1985 = vpop.f32.mrf.mxu0
  %v1986 = vadd.f32 %v1945, %v1985
  %v1987 = vpop.f32.mrf.mxu0
  %1988 = vdwg.mxu0
  %1989 = vmatprep.subr.bf16.mxu0 0
  %1990 = vmatpush1.bf16.msra.mxu0 %v1437
  %1991 = vmatprep.subr.bf16.mxu0 0
  %1992 = vmatpush1.bf16.msra.mxu0 %v1436
  %1993 = vmatprep.subr.bf16.mxu0 0
  %1994 = vmatpush1.bf16.msra.mxu0 %v1435
  %1995 = vmatprep.subr.bf16.mxu0 0
  %1996 = vmatpush1.bf16.msra.mxu0 %v1434
  %1997 = vmatprep.subr.bf16.mxu0 0
  %1998 = vmatpush1.bf16.msra.mxu0 %v1433
  %1999 = vmatprep.subr.bf16.mxu0 0
  %2000 = vmatpush1.bf16.msra.mxu0 %v1432
  %2001 = vmatprep.subr.bf16.mxu0 0
  %2002 = vmatpush1.bf16.msra.mxu0 %v1431
  %2003 = vmatprep.subr.bf16.mxu0 0
  %2004 = vmatpush1.bf16.msra.mxu0 %v1430
  %2005 = vmatprep.subr.bf16.mxu0 0
  %2006 = vmatpush2.bf16.msra.mxu0 %v1445
  %2007 = vmatprep.subr.bf16.mxu0 0
  %2008 = vmatpush2.bf16.msra.mxu0 %v1444
  %2009 = vmatprep.subr.bf16.mxu0 0
  %2010 = vmatpush2.bf16.msra.mxu0 %v1443
  %2011 = vmatprep.subr.bf16.mxu0 0
  %2012 = vmatpush2.bf16.msra.mxu0 %v1442
  %2013 = vmatprep.subr.bf16.mxu0 0
  %2014 = vmatpush2.bf16.msra.mxu0 %v1441
  %2015 = vmatprep.subr.bf16.mxu0 0
  %2016 = vmatpush2.bf16.msra.mxu0 %v1440
  %2017 = vmatprep.subr.bf16.mxu0 0
  %2018 = vmatpush2.bf16.msra.mxu0 %v1439
  %2019 = vmatprep.subr.bf16.mxu0 0
  %2020 = vmatpush2.bf16.msra.mxu0 %v1438
  %2021 = vmatprep.mubr.bf16.mxu0 %v517
  %2022 = vmatmul.mubr.bf16.gmra.mxu0 %v516
  %v2023 = vpop.f32.mrf.mxu0
  %v2024 = vadd.f32 %v1983, %v2023
  %v2025 = vpop.f32.mrf.mxu0
  %v2026 = vpop.f32.mrf.mxu0
  %v2027 = vadd.f32 %v1986, %v2026
  %v2028 = vpop.f32.mrf.mxu0
  %2029 = vdwg.mxu0
  %2030 = vmatprep.subr.bf16.mxu0 0
  %2031 = vmatpush1.bf16.msra.mxu0 %v1453
  %2032 = vmatprep.subr.bf16.mxu0 0
  %2033 = vmatpush1.bf16.msra.mxu0 %v1452
  %2034 = vmatprep.subr.bf16.mxu0 0
  %2035 = vmatpush1.bf16.msra.mxu0 %v1451
  %2036 = vmatprep.subr.bf16.mxu0 0
  %2037 = vmatpush1.bf16.msra.mxu0 %v1450
  %2038 = vmatprep.subr.bf16.mxu0 0
  %2039 = vmatpush1.bf16.msra.mxu0 %v1449
  %2040 = vmatprep.subr.bf16.mxu0 0
  %2041 = vmatpush1.bf16.msra.mxu0 %v1448
  %2042 = vmatprep.subr.bf16.mxu0 0
  %2043 = vmatpush1.bf16.msra.mxu0 %v1447
  %2044 = vmatprep.subr.bf16.mxu0 0
  %2045 = vmatpush1.bf16.msra.mxu0 %v1446
  %2046 = vmatprep.subr.bf16.mxu0 0
  %2047 = vmatpush2.bf16.msra.mxu0 %v1461
  %2048 = vmatprep.subr.bf16.mxu0 0
  %2049 = vmatpush2.bf16.msra.mxu0 %v1460
  %2050 = vmatprep.subr.bf16.mxu0 0
  %2051 = vmatpush2.bf16.msra.mxu0 %v1459
  %2052 = vmatprep.subr.bf16.mxu0 0
  %2053 = vmatpush2.bf16.msra.mxu0 %v1458
  %2054 = vmatprep.subr.bf16.mxu0 0
  %2055 = vmatpush2.bf16.msra.mxu0 %v1457
  %2056 = vmatprep.subr.bf16.mxu0 0
  %2057 = vmatpush2.bf16.msra.mxu0 %v1456
  %2058 = vmatprep.subr.bf16.mxu0 0
  %2059 = vmatpush2.bf16.msra.mxu0 %v1455
  %2060 = vmatprep.subr.bf16.mxu0 0
  %2061 = vmatpush2.bf16.msra.mxu0 %v1454
  %2062 = vmatprep.mubr.bf16.mxu0 %v519
  %2063 = vmatmul.mubr.bf16.gmra.mxu0 %v518
  %v2064 = vpop.f32.mrf.mxu0
  %v2065 = vadd.f32 %v2024, %v2064
  %v2066 = vpop.f32.mrf.mxu0
  %v2067 = vpop.f32.mrf.mxu0
  %v2068 = vadd.f32 %v2027, %v2067
  %v2069 = vpop.f32.mrf.mxu0
  %2070 = vdwg.mxu0
  %2071 = vmatprep.subr.bf16.mxu0 0
  %2072 = vmatpush1.bf16.msra.mxu0 %v1469
  %2073 = vmatprep.subr.bf16.mxu0 0
  %2074 = vmatpush1.bf16.msra.mxu0 %v1468
  %2075 = vmatprep.subr.bf16.mxu0 0
  %2076 = vmatpush1.bf16.msra.mxu0 %v1467
  %2077 = vmatprep.subr.bf16.mxu0 0
  %2078 = vmatpush1.bf16.msra.mxu0 %v1466
  %2079 = vmatprep.subr.bf16.mxu0 0
  %2080 = vmatpush1.bf16.msra.mxu0 %v1465
  %2081 = vmatprep.subr.bf16.mxu0 0
  %2082 = vmatpush1.bf16.msra.mxu0 %v1464
  %2083 = vmatprep.subr.bf16.mxu0 0
  %2084 = vmatpush1.bf16.msra.mxu0 %v1463
  %2085 = vmatprep.subr.bf16.mxu0 0
  %2086 = vmatpush1.bf16.msra.mxu0 %v1462
  %2087 = vmatprep.subr.bf16.mxu0 0
  %2088 = vmatpush2.bf16.msra.mxu0 %v1477
  %2089 = vmatprep.subr.bf16.mxu0 0
  %2090 = vmatpush2.bf16.msra.mxu0 %v1476
  %2091 = vmatprep.subr.bf16.mxu0 0
  %2092 = vmatpush2.bf16.msra.mxu0 %v1475
  %2093 = vmatprep.subr.bf16.mxu0 0
  %2094 = vmatpush2.bf16.msra.mxu0 %v1474
  %2095 = vmatprep.subr.bf16.mxu0 0
  %2096 = vmatpush2.bf16.msra.mxu0 %v1473
  %2097 = vmatprep.subr.bf16.mxu0 0
  %2098 = vmatpush2.bf16.msra.mxu0 %v1472
  %2099 = vmatprep.subr.bf16.mxu0 0
  %2100 = vmatpush2.bf16.msra.mxu0 %v1471
  %2101 = vmatprep.subr.bf16.mxu0 0
  %2102 = vmatpush2.bf16.msra.mxu0 %v1470
  %2103 = vmatprep.mubr.bf16.mxu0 %v521
  %2104 = vmatmul.mubr.bf16.gmra.mxu0 %v520
  %v2105 = vpop.f32.mrf.mxu0
  %v2106 = vadd.f32 %v2065, %v2105
  %v2107 = vpop.f32.mrf.mxu0
  %v2108 = vpop.f32.mrf.mxu0
  %v2109 = vadd.f32 %v2068, %v2108
  %v2110 = vpop.f32.mrf.mxu0
  %2111 = vdwg.mxu0
  %2112 = vmatprep.subr.bf16.mxu0 0
  %2113 = vmatpush1.bf16.msra.mxu0 %v1485
  %2114 = vmatprep.subr.bf16.mxu0 0
  %2115 = vmatpush1.bf16.msra.mxu0 %v1484
  %2116 = vmatprep.subr.bf16.mxu0 0
  %2117 = vmatpush1.bf16.msra.mxu0 %v1483
  %2118 = vmatprep.subr.bf16.mxu0 0
  %2119 = vmatpush1.bf16.msra.mxu0 %v1482
  %2120 = vmatprep.subr.bf16.mxu0 0
  %2121 = vmatpush1.bf16.msra.mxu0 %v1481
  %2122 = vmatprep.subr.bf16.mxu0 0
  %2123 = vmatpush1.bf16.msra.mxu0 %v1480
  %2124 = vmatprep.subr.bf16.mxu0 0
  %2125 = vmatpush1.bf16.msra.mxu0 %v1479
  %2126 = vmatprep.subr.bf16.mxu0 0
  %2127 = vmatpush1.bf16.msra.mxu0 %v1478
  %2128 = vmatprep.subr.bf16.mxu0 0
  %2129 = vmatpush2.bf16.msra.mxu0 %v1493
  %2130 = vmatprep.subr.bf16.mxu0 0
  %2131 = vmatpush2.bf16.msra.mxu0 %v1492
  %2132 = vmatprep.subr.bf16.mxu0 0
  %2133 = vmatpush2.bf16.msra.mxu0 %v1491
  %2134 = vmatprep.subr.bf16.mxu0 0
  %2135 = vmatpush2.bf16.msra.mxu0 %v1490
  %2136 = vmatprep.subr.bf16.mxu0 0
  %2137 = vmatpush2.bf16.msra.mxu0 %v1489
  %2138 = vmatprep.subr.bf16.mxu0 0
  %2139 = vmatpush2.bf16.msra.mxu0 %v1488
  %2140 = vmatprep.subr.bf16.mxu0 0
  %2141 = vmatpush2.bf16.msra.mxu0 %v1487
  %2142 = vmatprep.subr.bf16.mxu0 0
  %2143 = vmatpush2.bf16.msra.mxu0 %v1486
  %2144 = vmatprep.mubr.bf16.mxu0 %v523
  %2145 = vmatmul.mubr.bf16.gmra.mxu0 %v522
  %v2146 = vpop.f32.mrf.mxu0
  %v2147 = vadd.f32 %v2106, %v2146
  %v2148 = vpop.f32.mrf.mxu0
  %v2149 = vpop.f32.mrf.mxu0
  %v2150 = vadd.f32 %v2109, %v2149
  %v2151 = vpop.f32.mrf.mxu0
  %2152 = vdwg.mxu0
  %2153 = vmatprep.subr.bf16.mxu0 0
  %2154 = vmatpush1.bf16.msra.mxu0 %v1501
  %2155 = vmatprep.subr.bf16.mxu0 0
  %2156 = vmatpush1.bf16.msra.mxu0 %v1500
  %2157 = vmatprep.subr.bf16.mxu0 0
  %2158 = vmatpush1.bf16.msra.mxu0 %v1499
  %2159 = vmatprep.subr.bf16.mxu0 0
  %2160 = vmatpush1.bf16.msra.mxu0 %v1498
  %2161 = vmatprep.subr.bf16.mxu0 0
  %2162 = vmatpush1.bf16.msra.mxu0 %v1497
  %2163 = vmatprep.subr.bf16.mxu0 0
  %2164 = vmatpush1.bf16.msra.mxu0 %v1496
  %2165 = vmatprep.subr.bf16.mxu0 0
  %2166 = vmatpush1.bf16.msra.mxu0 %v1495
  %2167 = vmatprep.subr.bf16.mxu0 0
  %2168 = vmatpush1.bf16.msra.mxu0 %v1494
  %2169 = vmatprep.subr.bf16.mxu0 0
  %2170 = vmatpush2.bf16.msra.mxu0 %v1509
  %2171 = vmatprep.subr.bf16.mxu0 0
  %2172 = vmatpush2.bf16.msra.mxu0 %v1508
  %2173 = vmatprep.subr.bf16.mxu0 0
  %2174 = vmatpush2.bf16.msra.mxu0 %v1507
  %2175 = vmatprep.subr.bf16.mxu0 0
  %2176 = vmatpush2.bf16.msra.mxu0 %v1506
  %2177 = vmatprep.subr.bf16.mxu0 0
  %2178 = vmatpush2.bf16.msra.mxu0 %v1505
  %2179 = vmatprep.subr.bf16.mxu0 0
  %2180 = vmatpush2.bf16.msra.mxu0 %v1504
  %2181 = vmatprep.subr.bf16.mxu0 0
  %2182 = vmatpush2.bf16.msra.mxu0 %v1503
  %2183 = vmatprep.subr.bf16.mxu0 0
  %2184 = vmatpush2.bf16.msra.mxu0 %v1502
  %2185 = vmatprep.mubr.bf16.mxu0 %v525
  %2186 = vmatmul.mubr.bf16.gmra.mxu0 %v524
  %v2187 = vpop.f32.mrf.mxu0
  %v2188 = vadd.f32 %v2147, %v2187
  %v2189 = vpop.f32.mrf.mxu0
  %v2190 = vpop.f32.mrf.mxu0
  %v2191 = vadd.f32 %v2150, %v2190
  %v2192 = vpop.f32.mrf.mxu0
  %2193 = vdwg.mxu0
  %vm2194 = vcmask 80896
  %2195 = vst.msk [vmem:[%s3] sm:$0xff] %vm2194, %v2188
  %2196 = vst.msk [vmem:[%s3 + $0x8] sm:$0xff] %vm2194, %v2191
  // Predicated region
  $region14: #{classifier_forward.1} parent=0 // pred_check
    _
  $region15: #{classifier_forward.1} parent=0 // pred_check_branch
    %2198 = sbr.rel (0) target = $region17
  $region16: #{classifier_forward.1} parent=0 // pred_region
    _
  $region17: #{classifier_forward.1} parent=0 // pred_fallthru
    _
  // Predicated region
  $region18: #{classifier_forward.1} parent=0 // pred_check
    _
  $region19: #{classifier_forward.1} parent=0 // pred_check_branch
    %2200 = sbr.rel (0) target = $region21
  $region20: #{classifier_forward.1} parent=0 // pred_region
    _
  $region21: #{classifier_forward.1} parent=0 // pred_fallthru
    _

</llo_original>
